<compile_context>
chip_gen: v7x
topology: tpu7x:2x2x1
jax: 0.10.0
libtpu: 0.0.40
codegen_flags: <defaults>
</compile_context>

<pallas_src>
import numpy as np

import jax
import jax.numpy as jnp
from jax.experimental import pallas as pl
from jax.experimental.pallas import tpu as pltpu

_K = 4         # conv kernel size (all three convs of the module)
_S = 2         # conv stride      (all three convs of the module)
_KK = _K * _K
_CPAD = 128    # lane-dense padding of the final conv's Cout (=1)


def _critic_fused_kernel(p1_ref, w1_ref, b1_ref, w2_ref, b2_ref,
                         w3_ref, b3_ref, o_ref):
    """Fused Critic forward for one batch element.

    p1_ref : (1, R2, KK*KK*Cin) bf16  composed im2col patches (see wrapper)
    w1_ref : (KK*KK*Cin, KK*C1) bf16  block-diagonal conv1 weight
    b1_ref : (1, KK*C1)         f32   conv1 bias tiled per layer-2 tap
    w2_ref : (KK*C1, C2)        bf16  conv2 weight in im2col layout
    b2_ref : (1, C2)            f32
    w3_ref : (KK, C2, 128)      bf16  conv3 weight per tap, Cout padded to 128
    b3_ref : (1, 128)           f32
    o_ref  : (1, M3p, 128)      f32   padded conv3 output
    """
    f32 = jnp.float32
    bf16 = jnp.bfloat16
    slope = 0.2
    kk = w3_ref.shape[0]
    m3p = o_ref.shape[1]

    # ---- layer 1: one matmul; bias + LeakyReLU on the f32 accumulator ------
    a1 = jnp.dot(p1_ref[0], w1_ref[...], preferred_element_type=f32)
    a1 = a1 + b1_ref[...]
    a1 = jnp.where(a1 >= 0.0, a1, slope * a1).astype(bf16)

    # ---- layer 2: one matmul (K = KK*C1) ------------------------------------
    a2 = jnp.dot(a1, w2_ref[...], preferred_element_type=f32)
    a2 = a2 + b2_ref[...]
    a2 = jnp.where(a2 >= 0.0, a2, slope * a2).astype(bf16)

    # ---- layer 3: statically unrolled per-tap dots --------------------------
    # Row block t3 of a2 holds exactly the activations this tap needs
    # (ordering fixed by the wrapper's composed im2col).
    acc = jnp.zeros((m3p, o_ref.shape[2]), f32)
    for t3 in range(kk):
        acc = acc + jnp.dot(a2[t3 * m3p:(t3 + 1) * m3p, :], w3_ref[t3],
                            preferred_element_type=f32)
    acc = acc + b3_ref[...]
    o_ref[0] = acc.astype(o_ref.dtype)


def _conv_out(n):
    return (n - _K) // _S + 1


def init_critic_params(key, hidden_dim, im_chan=3):
    """Deterministic synthetic init (PyTorch-like uniform(-1/sqrt(fan_in), .))."""
    ks = jax.random.split(key, 6)

    def conv_init(kw_key, kb_key, cin, cout, k=_K):
        fan_in = cin * k * k
        bound = 1.0 / float(fan_in) ** 0.5
        w = jax.random.uniform(kw_key, (k, k, cin, cout), jnp.float32,
                               -bound, bound)
        b = jax.random.uniform(kb_key, (cout,), jnp.float32, -bound, bound)
        return w, b

    w1, b1 = conv_init(ks[0], ks[1], im_chan, hidden_dim)
    w2, b2 = conv_init(ks[2], ks[3], hidden_dim, hidden_dim * 2)
    w3, b3 = conv_init(ks[4], ks[5], hidden_dim * 2, 1)
    return (w1, b1, w2, b2, w3, b3)


def critic_forward(params, image_nchw):
    """Fused Pallas forward; image_nchw: (B, C, H, W) -> (B, flat)."""
    w1, b1, w2, b2, w3, b3 = params
    B, Cin, H, W = image_nchw.shape
    C1, C2, C3 = w1.shape[-1], w2.shape[-1], w3.shape[-1]
    # The composed-im2col layout below hard-codes 4x4 / stride-2 for all convs.
    assert w1.shape[:2] == w2.shape[:2] == w3.shape[:2] == (_K, _K)

    O1H, O1W = _conv_out(H), _conv_out(W)
    O2H, O2W = _conv_out(O1H), _conv_out(O1W)
    O3H, O3W = _conv_out(O2H), _conv_out(O2W)
    assert O3H >= 1 and O3W >= 1, "input too small for three k=4, s=2 convs"

    M3 = O3H * O3W                       # conv3 output positions
    M3p = max(8, -(-M3 // 8) * 8)        # sublane-aligned padding
    R2 = _KK * M3p                       # rows of the layer-1/2 activations
    KPATCH = _KK * _KK * Cin             # composed patch width (mult. of 128)

    # ---- composed im2col (wrapper side; pure data rearrangement) -----------
    # patches[b, t3*M3p + m3, t2*16*Cin + (i*4+j)*Cin + c]
    #   = x[b, 2*(2*(2*oh3+kh3)+kh2)+i, 2*(2*(2*ow3+kw3)+kw2)+j, c]
    # Padded (m3 >= M3) rows are zeroed so downstream garbage stays finite and
    # is sliced away at the end.
    x = jnp.transpose(image_nchw, (0, 2, 3, 1))                  # NHWC
    m3 = np.arange(M3p)
    valid = m3 < M3
    oh3 = np.where(valid, m3 // O3W, 0)
    ow3 = np.where(valid, m3 % O3W, 0)
    kh = np.arange(_KK) // _K
    kw = np.arange(_KK) % _K
    i2 = _S * oh3[None, :] + kh[:, None]                  # (KK, M3p)        [t3, m3]
    j2 = _S * ow3[None, :] + kw[:, None]
    i1 = _S * i2[:, :, None] + kh[None, None, :]          # (KK, M3p, KK)    [.., t2]
    j1 = _S * j2[:, :, None] + kw[None, None, :]
    i0 = _S * i1[..., None] + kh[None, None, None, :]     # (KK, M3p, KK, KK)[.., ij]
    j0 = _S * j1[..., None] + kw[None, None, None, :]
    patches = x[:, i0, j0, :]                             # (B, KK, M3p, KK, KK, Cin)
    patches = patches * jnp.asarray(valid.reshape(1, 1, M3p, 1, 1, 1), x.dtype)
    patches = patches.reshape(B, R2, KPATCH).astype(jnp.bfloat16)

    # ---- weights in the layouts the kernel expects --------------------------
    w1f = w1.reshape(_KK * Cin, C1)
    w1bd = jnp.kron(jnp.eye(_KK, dtype=w1f.dtype), w1f).astype(jnp.bfloat16)
    b1t = jnp.tile(b1, _KK).reshape(1, _KK * C1).astype(jnp.float32)
    w2f = w2.reshape(_KK * C1, C2).astype(jnp.bfloat16)
    b2r = b2.reshape(1, C2).astype(jnp.float32)
    w3s = (jnp.zeros((_KK, C2, _CPAD), jnp.float32)
              .at[:, :, :C3].set(w3.reshape(_KK, C2, C3))).astype(jnp.bfloat16)
    b3p = jnp.zeros((1, _CPAD), jnp.float32).at[0, :C3].set(b3)

    out_padded = pl.pallas_call(
        _critic_fused_kernel,
        out_shape=jax.ShapeDtypeStruct((B, M3p, _CPAD), jnp.float32),
        grid_spec=pltpu.PrefetchScalarGridSpec(
            num_scalar_prefetch=0,
            grid=(B,),
            in_specs=[
                pl.BlockSpec((1, R2, KPATCH), lambda b: (b, 0, 0)),
                pl.BlockSpec((KPATCH, _KK * C1), lambda b: (0, 0)),
                pl.BlockSpec((1, _KK * C1), lambda b: (0, 0)),
                pl.BlockSpec((_KK * C1, C2), lambda b: (0, 0)),
                pl.BlockSpec((1, C2), lambda b: (0, 0)),
                pl.BlockSpec((_KK, C2, _CPAD), lambda b: (0, 0, 0)),
                pl.BlockSpec((1, _CPAD), lambda b: (0, 0)),
            ],
            out_specs=pl.BlockSpec((1, M3p, _CPAD), lambda b: (b, 0, 0)),
        ),
        compiler_params=pltpu.CompilerParams(
            dimension_semantics=("parallel",)),
    )(patches, w1bd, b1t, w2f, b2r, w3s, b3p)

    # keep the real channel(s)/positions; flatten exactly like crit_pred.view(B, -1)
    out = out_padded[:, :M3, :C3]                         # (B, M3, C3)
    return jnp.transpose(out, (0, 2, 1)).reshape(B, C3 * M3)


def critic_reference(params, image_nchw):
    """Plain-JAX reference (lax.conv, f32) for correctness check."""
    w1, b1, w2, b2, w3, b3 = params
    x = jnp.transpose(image_nchw, (0, 2, 3, 1))

    def conv(x, w, b):
        y = jax.lax.conv_general_dilated(
            x, w, window_strides=(_S, _S), padding="VALID",
            dimension_numbers=("NHWC", "HWIO", "NHWC"))
        return y + b

    x = conv(x, w1, b1)
    x = jnp.where(x >= 0, x, 0.2 * x)
    x = conv(x, w2, b2)
    x = jnp.where(x >= 0, x, 0.2 * x)
    x = conv(x, w3, b3)
    B = x.shape[0]
    return jnp.transpose(x, (0, 3, 1, 2)).reshape(B, -1)


if __name__ == "__main__":
    key = jax.random.PRNGKey(0)
    k_params, k_img = jax.random.split(key)

    batch, im_chan, hidden_dim = 2, 3, 8
    H = W = 28  # 28 -> 13 -> 5 -> 1 through three (k=4, s=2) valid convs

    params = init_critic_params(k_params, hidden_dim, im_chan)
    image = jax.random.normal(k_img, (batch, im_chan, H, W), jnp.float32)

    out = jax.jit(critic_forward)(params, image)
    out = jax.block_until_ready(out)

    ref = critic_reference(params, image)
    assert out.shape == (batch, 1), out.shape
    # bf16 matmul operands with f32 accumulation vs. the f32 reference
    assert jnp.allclose(out, ref, atol=3e-2, rtol=3e-2), (out, ref)

    print("KERNEL_OK")
</pallas_src>

<mosaic_0001>
module attributes {stable_mosaic.version = 11 : i64} {
  func.func @_critic_fused_kernel(%arg0: i32, %arg1: memref<1x128x768xbf16, #tpu.memory_space<vmem>>, %arg2: memref<768x128xbf16, #tpu.memory_space<vmem>>, %arg3: memref<1x128xf32, #tpu.memory_space<vmem>>, %arg4: memref<128x16xbf16, #tpu.memory_space<vmem>>, %arg5: memref<1x16xf32, #tpu.memory_space<vmem>>, %arg6: memref<16x16x128xbf16, #tpu.memory_space<vmem>>, %arg7: memref<1x128xf32, #tpu.memory_space<vmem>>, %arg8: memref<1x8x128xf32, #tpu.memory_space<vmem>>) attributes {dimension_semantics = [#tpu.dimension_semantics<parallel>], iteration_bounds = array<i64: 2>, scalar_prefetch = 0 : i64, scratch_operands = 0 : i64, tpu.core_type = #tpu.core_type<tc>, window_params = [{transform_indices = @transform_0, window_bounds = array<i64: 1, 128, 768>}, {pipeline_mode = #tpu.pipeline_mode<synchronous>, transform_indices = @transform_1, window_bounds = array<i64: 768, 128>}, {pipeline_mode = #tpu.pipeline_mode<synchronous>, transform_indices = @transform_2, window_bounds = array<i64: 1, 128>}, {pipeline_mode = #tpu.pipeline_mode<synchronous>, transform_indices = @transform_3, window_bounds = array<i64: 128, 16>}, {pipeline_mode = #tpu.pipeline_mode<synchronous>, transform_indices = @transform_4, window_bounds = array<i64: 1, 16>}, {pipeline_mode = #tpu.pipeline_mode<synchronous>, transform_indices = @transform_5, window_bounds = array<i64: 16, 16, 128>}, {pipeline_mode = #tpu.pipeline_mode<synchronous>, transform_indices = @transform_6, window_bounds = array<i64: 1, 128>}, {transform_indices = @transform_7, window_bounds = array<i64: 1, 8, 128>}]} {
    %c0 = arith.constant 0 : index
    %c0_0 = arith.constant 0 : index
    %c0_1 = arith.constant 0 : index
    %0 = vector.load %arg1[%c0, %c0_0, %c0_1] : memref<1x128x768xbf16, #tpu.memory_space<vmem>>, vector<1x128x768xbf16>
    %1 = vector.shape_cast %0 : vector<1x128x768xbf16> to vector<128x768xbf16>
    %c0_2 = arith.constant 0 : index
    %c0_3 = arith.constant 0 : index
    %2 = vector.load %arg2[%c0_2, %c0_3] : memref<768x128xbf16, #tpu.memory_space<vmem>>, vector<768x128xbf16>
    %cst = arith.constant dense<0.000000e+00> : vector<128x128xf32>
    %3 = tpu.matmul %1, %2, %cst {dimension_numbers = #tpu.dot_dimension_numbers<[1], [0], [0], [1], [0, 0, 1, 1], [], []>} : vector<128x768xbf16>, vector<768x128xbf16>, vector<128x128xf32> -> vector<128x128xf32>
    %c0_4 = arith.constant 0 : index
    %c0_5 = arith.constant 0 : index
    %4 = vector.load %arg3[%c0_4, %c0_5] : memref<1x128xf32, #tpu.memory_space<vmem>>, vector<1x128xf32>
    %5 = vector.broadcast %4 : vector<1x128xf32> to vector<128x128xf32>
    %6 = arith.addf %3, %5 : vector<128x128xf32>
    %cst_6 = arith.constant 0.000000e+00 : f32
    %7 = vector.broadcast %cst_6 : f32 to vector<128x128xf32>
    %8 = arith.cmpf oge, %6, %7 : vector<128x128xf32>
    %cst_7 = arith.constant 2.000000e-01 : f32
    %9 = vector.broadcast %cst_7 : f32 to vector<128x128xf32>
    %10 = arith.mulf %9, %6 : vector<128x128xf32>
    %11 = arith.select %8, %6, %10 : vector<128x128xi1>, vector<128x128xf32>
    %12 = arith.truncf %11 : vector<128x128xf32> to vector<128x128xbf16>
    %c0_8 = arith.constant 0 : index
    %c0_9 = arith.constant 0 : index
    %13 = vector.load %arg4[%c0_8, %c0_9] : memref<128x16xbf16, #tpu.memory_space<vmem>>, vector<128x16xbf16>
    %cst_10 = arith.constant dense<0.000000e+00> : vector<128x16xf32>
    %14 = tpu.matmul %12, %13, %cst_10 {dimension_numbers = #tpu.dot_dimension_numbers<[1], [0], [0], [1], [0, 0, 1, 1], [], []>} : vector<128x128xbf16>, vector<128x16xbf16>, vector<128x16xf32> -> vector<128x16xf32>
    %c0_11 = arith.constant 0 : index
    %c0_12 = arith.constant 0 : index
    %15 = vector.load %arg5[%c0_11, %c0_12] : memref<1x16xf32, #tpu.memory_space<vmem>>, vector<1x16xf32>
    %16 = vector.broadcast %15 : vector<1x16xf32> to vector<128x16xf32>
    %17 = arith.addf %14, %16 : vector<128x16xf32>
    %cst_13 = arith.constant 0.000000e+00 : f32
    %18 = vector.broadcast %cst_13 : f32 to vector<128x16xf32>
    %19 = arith.cmpf oge, %17, %18 : vector<128x16xf32>
    %cst_14 = arith.constant 2.000000e-01 : f32
    %20 = vector.broadcast %cst_14 : f32 to vector<128x16xf32>
    %21 = arith.mulf %20, %17 : vector<128x16xf32>
    %22 = arith.select %19, %17, %21 : vector<128x16xi1>, vector<128x16xf32>
    %23 = arith.truncf %22 : vector<128x16xf32> to vector<128x16xbf16>
    %cst_15 = arith.constant 0.000000e+00 : f32
    %24 = vector.broadcast %cst_15 : f32 to vector<8x128xf32>
    %25 = vector.extract_strided_slice %23 {offsets = [0, 0], sizes = [8, 16], strides = [1, 1]} : vector<128x16xbf16> to vector<8x16xbf16>
    %c0_16 = arith.constant 0 : index
    %c0_17 = arith.constant 0 : index
    %c0_18 = arith.constant 0 : index
    %26 = vector.load %arg6[%c0_16, %c0_17, %c0_18] : memref<16x16x128xbf16, #tpu.memory_space<vmem>>, vector<1x16x128xbf16>
    %27 = vector.shape_cast %26 : vector<1x16x128xbf16> to vector<16x128xbf16>
    %cst_19 = arith.constant dense<0.000000e+00> : vector<8x128xf32>
    %28 = tpu.matmul %25, %27, %cst_19 {dimension_numbers = #tpu.dot_dimension_numbers<[1], [0], [0], [1], [0, 0, 1, 1], [], []>} : vector<8x16xbf16>, vector<16x128xbf16>, vector<8x128xf32> -> vector<8x128xf32>
    %29 = arith.addf %24, %28 : vector<8x128xf32>
    %30 = vector.extract_strided_slice %23 {offsets = [8, 0], sizes = [8, 16], strides = [1, 1]} : vector<128x16xbf16> to vector<8x16xbf16>
    %c1 = arith.constant 1 : index
    %c0_20 = arith.constant 0 : index
    %c0_21 = arith.constant 0 : index
    %31 = vector.load %arg6[%c1, %c0_20, %c0_21] : memref<16x16x128xbf16, #tpu.memory_space<vmem>>, vector<1x16x128xbf16>
    %32 = vector.shape_cast %31 : vector<1x16x128xbf16> to vector<16x128xbf16>
    %cst_22 = arith.constant dense<0.000000e+00> : vector<8x128xf32>
    %33 = tpu.matmul %30, %32, %cst_22 {dimension_numbers = #tpu.dot_dimension_numbers<[1], [0], [0], [1], [0, 0, 1, 1], [], []>} : vector<8x16xbf16>, vector<16x128xbf16>, vector<8x128xf32> -> vector<8x128xf32>
    %34 = arith.addf %29, %33 : vector<8x128xf32>
    %35 = vector.extract_strided_slice %23 {offsets = [16, 0], sizes = [8, 16], strides = [1, 1]} : vector<128x16xbf16> to vector<8x16xbf16>
    %c2 = arith.constant 2 : index
    %c0_23 = arith.constant 0 : index
    %c0_24 = arith.constant 0 : index
    %36 = vector.load %arg6[%c2, %c0_23, %c0_24] : memref<16x16x128xbf16, #tpu.memory_space<vmem>>, vector<1x16x128xbf16>
    %37 = vector.shape_cast %36 : vector<1x16x128xbf16> to vector<16x128xbf16>
    %cst_25 = arith.constant dense<0.000000e+00> : vector<8x128xf32>
    %38 = tpu.matmul %35, %37, %cst_25 {dimension_numbers = #tpu.dot_dimension_numbers<[1], [0], [0], [1], [0, 0, 1, 1], [], []>} : vector<8x16xbf16>, vector<16x128xbf16>, vector<8x128xf32> -> vector<8x128xf32>
    %39 = arith.addf %34, %38 : vector<8x128xf32>
    %40 = vector.extract_strided_slice %23 {offsets = [24, 0], sizes = [8, 16], strides = [1, 1]} : vector<128x16xbf16> to vector<8x16xbf16>
    %c3 = arith.constant 3 : index
    %c0_26 = arith.constant 0 : index
    %c0_27 = arith.constant 0 : index
    %41 = vector.load %arg6[%c3, %c0_26, %c0_27] : memref<16x16x128xbf16, #tpu.memory_space<vmem>>, vector<1x16x128xbf16>
    %42 = vector.shape_cast %41 : vector<1x16x128xbf16> to vector<16x128xbf16>
    %cst_28 = arith.constant dense<0.000000e+00> : vector<8x128xf32>
    %43 = tpu.matmul %40, %42, %cst_28 {dimension_numbers = #tpu.dot_dimension_numbers<[1], [0], [0], [1], [0, 0, 1, 1], [], []>} : vector<8x16xbf16>, vector<16x128xbf16>, vector<8x128xf32> -> vector<8x128xf32>
    %44 = arith.addf %39, %43 : vector<8x128xf32>
    %45 = vector.extract_strided_slice %23 {offsets = [32, 0], sizes = [8, 16], strides = [1, 1]} : vector<128x16xbf16> to vector<8x16xbf16>
    %c4 = arith.constant 4 : index
    %c0_29 = arith.constant 0 : index
    %c0_30 = arith.constant 0 : index
    %46 = vector.load %arg6[%c4, %c0_29, %c0_30] : memref<16x16x128xbf16, #tpu.memory_space<vmem>>, vector<1x16x128xbf16>
    %47 = vector.shape_cast %46 : vector<1x16x128xbf16> to vector<16x128xbf16>
    %cst_31 = arith.constant dense<0.000000e+00> : vector<8x128xf32>
    %48 = tpu.matmul %45, %47, %cst_31 {dimension_numbers = #tpu.dot_dimension_numbers<[1], [0], [0], [1], [0, 0, 1, 1], [], []>} : vector<8x16xbf16>, vector<16x128xbf16>, vector<8x128xf32> -> vector<8x128xf32>
    %49 = arith.addf %44, %48 : vector<8x128xf32>
    %50 = vector.extract_strided_slice %23 {offsets = [40, 0], sizes = [8, 16], strides = [1, 1]} : vector<128x16xbf16> to vector<8x16xbf16>
    %c5 = arith.constant 5 : index
    %c0_32 = arith.constant 0 : index
    %c0_33 = arith.constant 0 : index
    %51 = vector.load %arg6[%c5, %c0_32, %c0_33] : memref<16x16x128xbf16, #tpu.memory_space<vmem>>, vector<1x16x128xbf16>
    %52 = vector.shape_cast %51 : vector<1x16x128xbf16> to vector<16x128xbf16>
    %cst_34 = arith.constant dense<0.000000e+00> : vector<8x128xf32>
    %53 = tpu.matmul %50, %52, %cst_34 {dimension_numbers = #tpu.dot_dimension_numbers<[1], [0], [0], [1], [0, 0, 1, 1], [], []>} : vector<8x16xbf16>, vector<16x128xbf16>, vector<8x128xf32> -> vector<8x128xf32>
    %54 = arith.addf %49, %53 : vector<8x128xf32>
    %55 = vector.extract_strided_slice %23 {offsets = [48, 0], sizes = [8, 16], strides = [1, 1]} : vector<128x16xbf16> to vector<8x16xbf16>
    %c6 = arith.constant 6 : index
    %c0_35 = arith.constant 0 : index
    %c0_36 = arith.constant 0 : index
    %56 = vector.load %arg6[%c6, %c0_35, %c0_36] : memref<16x16x128xbf16, #tpu.memory_space<vmem>>, vector<1x16x128xbf16>
    %57 = vector.shape_cast %56 : vector<1x16x128xbf16> to vector<16x128xbf16>
    %cst_37 = arith.constant dense<0.000000e+00> : vector<8x128xf32>
    %58 = tpu.matmul %55, %57, %cst_37 {dimension_numbers = #tpu.dot_dimension_numbers<[1], [0], [0], [1], [0, 0, 1, 1], [], []>} : vector<8x16xbf16>, vector<16x128xbf16>, vector<8x128xf32> -> vector<8x128xf32>
    %59 = arith.addf %54, %58 : vector<8x128xf32>
    %60 = vector.extract_strided_slice %23 {offsets = [56, 0], sizes = [8, 16], strides = [1, 1]} : vector<128x16xbf16> to vector<8x16xbf16>
    %c7 = arith.constant 7 : index
    %c0_38 = arith.constant 0 : index
    %c0_39 = arith.constant 0 : index
    %61 = vector.load %arg6[%c7, %c0_38, %c0_39] : memref<16x16x128xbf16, #tpu.memory_space<vmem>>, vector<1x16x128xbf16>
    %62 = vector.shape_cast %61 : vector<1x16x128xbf16> to vector<16x128xbf16>
    %cst_40 = arith.constant dense<0.000000e+00> : vector<8x128xf32>
    %63 = tpu.matmul %60, %62, %cst_40 {dimension_numbers = #tpu.dot_dimension_numbers<[1], [0], [0], [1], [0, 0, 1, 1], [], []>} : vector<8x16xbf16>, vector<16x128xbf16>, vector<8x128xf32> -> vector<8x128xf32>
    %64 = arith.addf %59, %63 : vector<8x128xf32>
    %65 = vector.extract_strided_slice %23 {offsets = [64, 0], sizes = [8, 16], strides = [1, 1]} : vector<128x16xbf16> to vector<8x16xbf16>
    %c8 = arith.constant 8 : index
    %c0_41 = arith.constant 0 : index
    %c0_42 = arith.constant 0 : index
    %66 = vector.load %arg6[%c8, %c0_41, %c0_42] : memref<16x16x128xbf16, #tpu.memory_space<vmem>>, vector<1x16x128xbf16>
    %67 = vector.shape_cast %66 : vector<1x16x128xbf16> to vector<16x128xbf16>
    %cst_43 = arith.constant dense<0.000000e+00> : vector<8x128xf32>
    %68 = tpu.matmul %65, %67, %cst_43 {dimension_numbers = #tpu.dot_dimension_numbers<[1], [0], [0], [1], [0, 0, 1, 1], [], []>} : vector<8x16xbf16>, vector<16x128xbf16>, vector<8x128xf32> -> vector<8x128xf32>
    %69 = arith.addf %64, %68 : vector<8x128xf32>
    %70 = vector.extract_strided_slice %23 {offsets = [72, 0], sizes = [8, 16], strides = [1, 1]} : vector<128x16xbf16> to vector<8x16xbf16>
    %c9 = arith.constant 9 : index
    %c0_44 = arith.constant 0 : index
    %c0_45 = arith.constant 0 : index
    %71 = vector.load %arg6[%c9, %c0_44, %c0_45] : memref<16x16x128xbf16, #tpu.memory_space<vmem>>, vector<1x16x128xbf16>
    %72 = vector.shape_cast %71 : vector<1x16x128xbf16> to vector<16x128xbf16>
    %cst_46 = arith.constant dense<0.000000e+00> : vector<8x128xf32>
    %73 = tpu.matmul %70, %72, %cst_46 {dimension_numbers = #tpu.dot_dimension_numbers<[1], [0], [0], [1], [0, 0, 1, 1], [], []>} : vector<8x16xbf16>, vector<16x128xbf16>, vector<8x128xf32> -> vector<8x128xf32>
    %74 = arith.addf %69, %73 : vector<8x128xf32>
    %75 = vector.extract_strided_slice %23 {offsets = [80, 0], sizes = [8, 16], strides = [1, 1]} : vector<128x16xbf16> to vector<8x16xbf16>
    %c10 = arith.constant 10 : index
    %c0_47 = arith.constant 0 : index
    %c0_48 = arith.constant 0 : index
    %76 = vector.load %arg6[%c10, %c0_47, %c0_48] : memref<16x16x128xbf16, #tpu.memory_space<vmem>>, vector<1x16x128xbf16>
    %77 = vector.shape_cast %76 : vector<1x16x128xbf16> to vector<16x128xbf16>
    %cst_49 = arith.constant dense<0.000000e+00> : vector<8x128xf32>
    %78 = tpu.matmul %75, %77, %cst_49 {dimension_numbers = #tpu.dot_dimension_numbers<[1], [0], [0], [1], [0, 0, 1, 1], [], []>} : vector<8x16xbf16>, vector<16x128xbf16>, vector<8x128xf32> -> vector<8x128xf32>
    %79 = arith.addf %74, %78 : vector<8x128xf32>
    %80 = vector.extract_strided_slice %23 {offsets = [88, 0], sizes = [8, 16], strides = [1, 1]} : vector<128x16xbf16> to vector<8x16xbf16>
    %c11 = arith.constant 11 : index
    %c0_50 = arith.constant 0 : index
    %c0_51 = arith.constant 0 : index
    %81 = vector.load %arg6[%c11, %c0_50, %c0_51] : memref<16x16x128xbf16, #tpu.memory_space<vmem>>, vector<1x16x128xbf16>
    %82 = vector.shape_cast %81 : vector<1x16x128xbf16> to vector<16x128xbf16>
    %cst_52 = arith.constant dense<0.000000e+00> : vector<8x128xf32>
    %83 = tpu.matmul %80, %82, %cst_52 {dimension_numbers = #tpu.dot_dimension_numbers<[1], [0], [0], [1], [0, 0, 1, 1], [], []>} : vector<8x16xbf16>, vector<16x128xbf16>, vector<8x128xf32> -> vector<8x128xf32>
    %84 = arith.addf %79, %83 : vector<8x128xf32>
    %85 = vector.extract_strided_slice %23 {offsets = [96, 0], sizes = [8, 16], strides = [1, 1]} : vector<128x16xbf16> to vector<8x16xbf16>
    %c12 = arith.constant 12 : index
    %c0_53 = arith.constant 0 : index
    %c0_54 = arith.constant 0 : index
    %86 = vector.load %arg6[%c12, %c0_53, %c0_54] : memref<16x16x128xbf16, #tpu.memory_space<vmem>>, vector<1x16x128xbf16>
    %87 = vector.shape_cast %86 : vector<1x16x128xbf16> to vector<16x128xbf16>
    %cst_55 = arith.constant dense<0.000000e+00> : vector<8x128xf32>
    %88 = tpu.matmul %85, %87, %cst_55 {dimension_numbers = #tpu.dot_dimension_numbers<[1], [0], [0], [1], [0, 0, 1, 1], [], []>} : vector<8x16xbf16>, vector<16x128xbf16>, vector<8x128xf32> -> vector<8x128xf32>
    %89 = arith.addf %84, %88 : vector<8x128xf32>
    %90 = vector.extract_strided_slice %23 {offsets = [104, 0], sizes = [8, 16], strides = [1, 1]} : vector<128x16xbf16> to vector<8x16xbf16>
    %c13 = arith.constant 13 : index
    %c0_56 = arith.constant 0 : index
    %c0_57 = arith.constant 0 : index
    %91 = vector.load %arg6[%c13, %c0_56, %c0_57] : memref<16x16x128xbf16, #tpu.memory_space<vmem>>, vector<1x16x128xbf16>
    %92 = vector.shape_cast %91 : vector<1x16x128xbf16> to vector<16x128xbf16>
    %cst_58 = arith.constant dense<0.000000e+00> : vector<8x128xf32>
    %93 = tpu.matmul %90, %92, %cst_58 {dimension_numbers = #tpu.dot_dimension_numbers<[1], [0], [0], [1], [0, 0, 1, 1], [], []>} : vector<8x16xbf16>, vector<16x128xbf16>, vector<8x128xf32> -> vector<8x128xf32>
    %94 = arith.addf %89, %93 : vector<8x128xf32>
    %95 = vector.extract_strided_slice %23 {offsets = [112, 0], sizes = [8, 16], strides = [1, 1]} : vector<128x16xbf16> to vector<8x16xbf16>
    %c14 = arith.constant 14 : index
    %c0_59 = arith.constant 0 : index
    %c0_60 = arith.constant 0 : index
    %96 = vector.load %arg6[%c14, %c0_59, %c0_60] : memref<16x16x128xbf16, #tpu.memory_space<vmem>>, vector<1x16x128xbf16>
    %97 = vector.shape_cast %96 : vector<1x16x128xbf16> to vector<16x128xbf16>
    %cst_61 = arith.constant dense<0.000000e+00> : vector<8x128xf32>
    %98 = tpu.matmul %95, %97, %cst_61 {dimension_numbers = #tpu.dot_dimension_numbers<[1], [0], [0], [1], [0, 0, 1, 1], [], []>} : vector<8x16xbf16>, vector<16x128xbf16>, vector<8x128xf32> -> vector<8x128xf32>
    %99 = arith.addf %94, %98 : vector<8x128xf32>
    %100 = vector.extract_strided_slice %23 {offsets = [120, 0], sizes = [8, 16], strides = [1, 1]} : vector<128x16xbf16> to vector<8x16xbf16>
    %c15 = arith.constant 15 : index
    %c0_62 = arith.constant 0 : index
    %c0_63 = arith.constant 0 : index
    %101 = vector.load %arg6[%c15, %c0_62, %c0_63] : memref<16x16x128xbf16, #tpu.memory_space<vmem>>, vector<1x16x128xbf16>
    %102 = vector.shape_cast %101 : vector<1x16x128xbf16> to vector<16x128xbf16>
    %cst_64 = arith.constant dense<0.000000e+00> : vector<8x128xf32>
    %103 = tpu.matmul %100, %102, %cst_64 {dimension_numbers = #tpu.dot_dimension_numbers<[1], [0], [0], [1], [0, 0, 1, 1], [], []>} : vector<8x16xbf16>, vector<16x128xbf16>, vector<8x128xf32> -> vector<8x128xf32>
    %104 = arith.addf %99, %103 : vector<8x128xf32>
    %c0_65 = arith.constant 0 : index
    %c0_66 = arith.constant 0 : index
    %105 = vector.load %arg7[%c0_65, %c0_66] : memref<1x128xf32, #tpu.memory_space<vmem>>, vector<1x128xf32>
    %106 = vector.broadcast %105 : vector<1x128xf32> to vector<8x128xf32>
    %107 = arith.addf %104, %106 : vector<8x128xf32>
    %c0_67 = arith.constant 0 : index
    %c0_68 = arith.constant 0 : index
    %c0_69 = arith.constant 0 : index
    %108 = vector.load %arg8[%c0_67, %c0_68, %c0_69] : memref<1x8x128xf32, #tpu.memory_space<vmem>>, vector<1x8x128xf32>
    %109 = vector.shape_cast %108 : vector<1x8x128xf32> to vector<8x128xf32>
    %110 = vector.shape_cast %107 : vector<8x128xf32> to vector<1x8x128xf32>
    tpu.vector_store %arg8[%c0_67, %c0_68, %c0_69], %110 {strides = array<i32>} : memref<1x8x128xf32, #tpu.memory_space<vmem>>, vector<1x8x128xf32>,
    return
  }
  func.func @transform_0(%arg0: i32) -> (i32, i32, i32) {
    %c0_i32 = arith.constant 0 : i32
    %c0_i32_0 = arith.constant 0 : i32
    %c0_i32_1 = arith.constant 0 : i32
    return %arg0, %c0_i32, %c0_i32_0 : i32, i32, i32
  }
  func.func @transform_1(%arg0: i32) -> (i32, i32) {
    %c0_i32 = arith.constant 0 : i32
    %c0_i32_0 = arith.constant 0 : i32
    %c0_i32_1 = arith.constant 0 : i32
    return %c0_i32, %c0_i32_0 : i32, i32
  }
  func.func @transform_2(%arg0: i32) -> (i32, i32) {
    %c0_i32 = arith.constant 0 : i32
    %c0_i32_0 = arith.constant 0 : i32
    %c0_i32_1 = arith.constant 0 : i32
    return %c0_i32, %c0_i32_0 : i32, i32
  }
  func.func @transform_3(%arg0: i32) -> (i32, i32) {
    %c0_i32 = arith.constant 0 : i32
    %c0_i32_0 = arith.constant 0 : i32
    %c0_i32_1 = arith.constant 0 : i32
    return %c0_i32, %c0_i32_0 : i32, i32
  }
  func.func @transform_4(%arg0: i32) -> (i32, i32) {
    %c0_i32 = arith.constant 0 : i32
    %c0_i32_0 = arith.constant 0 : i32
    %c0_i32_1 = arith.constant 0 : i32
    return %c0_i32, %c0_i32_0 : i32, i32
  }
  func.func @transform_5(%arg0: i32) -> (i32, i32, i32) {
    %c0_i32 = arith.constant 0 : i32
    %c0_i32_0 = arith.constant 0 : i32
    %c0_i32_1 = arith.constant 0 : i32
    %c0_i32_2 = arith.constant 0 : i32
    return %c0_i32, %c0_i32_0, %c0_i32_1 : i32, i32, i32
  }
  func.func @transform_6(%arg0: i32) -> (i32, i32) {
    %c0_i32 = arith.constant 0 : i32
    %c0_i32_0 = arith.constant 0 : i32
    %c0_i32_1 = arith.constant 0 : i32
    return %c0_i32, %c0_i32_0 : i32, i32
  }
  func.func @transform_7(%arg0: i32) -> (i32, i32, i32) {
    %c0_i32 = arith.constant 0 : i32
    %c0_i32_0 = arith.constant 0 : i32
    %c0_i32_1 = arith.constant 0 : i32
    return %arg0, %c0_i32, %c0_i32_0 : i32, i32, i32
  }
}

</mosaic_0001>

<llo_original>
// kernel: mul.4
$region0: #{mul.4}
  %s0 = inlined_call_operand.vmem [shape: f32[4,4,3,8], index: 0, kind: input, shape index: {}]
  %s1 = inlined_call_operand.vmem [shape: f32[48,8], index: 1, kind: output, shape index: {}]
  $region1: #{mul.4} parent=0
    #allocation0 [shape = 'u8[65536]{0}', space=vmem, size = 0x10000, scoped, tag = 'scoped mem for input reshape']
    %s3 = sshllo.u32 0, 4
    %s4 = smul.addr 4, 15
    %s5 = scalar_lea.vmem %s0, %s4
    %v6 = vld [vmem:[%s5] sm:%s3]
    %s7 = scalar_lea.vmem [#allocation0], 120
    %8 = vst [vmem:[%s7] sm:%s3] %v6
    %s9 = smul.addr 4, 14
    %s10 = scalar_lea.vmem %s0, %s9
    %v11 = vld [vmem:[%s10] sm:%s3]
    %s12 = scalar_lea.vmem [#allocation0], 112
    %13 = vst [vmem:[%s12] sm:%s3] %v11
    %s14 = smul.addr 4, 13
    %s15 = scalar_lea.vmem %s0, %s14
    %v16 = vld [vmem:[%s15] sm:%s3]
    %s17 = scalar_lea.vmem [#allocation0], 104
    %18 = vst [vmem:[%s17] sm:%s3] %v16
    %s19 = smul.addr 4, 12
    %s20 = scalar_lea.vmem %s0, %s19
    %v21 = vld [vmem:[%s20] sm:%s3]
    %s22 = scalar_lea.vmem [#allocation0], 96
    %23 = vst [vmem:[%s22] sm:%s3] %v21
    %s24 = smul.addr 4, 11
    %s25 = scalar_lea.vmem %s0, %s24
    %v26 = vld [vmem:[%s25] sm:%s3]
    %s27 = scalar_lea.vmem [#allocation0], 88
    %28 = vst [vmem:[%s27] sm:%s3] %v26
    %s29 = smul.addr 4, 10
    %s30 = scalar_lea.vmem %s0, %s29
    %v31 = vld [vmem:[%s30] sm:%s3]
    %s32 = scalar_lea.vmem [#allocation0], 80
    %33 = vst [vmem:[%s32] sm:%s3] %v31
    %s34 = smul.addr 4, 9
    %s35 = scalar_lea.vmem %s0, %s34
    %v36 = vld [vmem:[%s35] sm:%s3]
    %s37 = scalar_lea.vmem [#allocation0], 72
    %38 = vst [vmem:[%s37] sm:%s3] %v36
    %s39 = smul.addr 4, 8
    %s40 = scalar_lea.vmem %s0, %s39
    %v41 = vld [vmem:[%s40] sm:%s3]
    %s42 = scalar_lea.vmem [#allocation0], 64
    %43 = vst [vmem:[%s42] sm:%s3] %v41
    %s44 = smul.addr 4, 7
    %s45 = scalar_lea.vmem %s0, %s44
    %v46 = vld [vmem:[%s45] sm:%s3]
    %s47 = scalar_lea.vmem [#allocation0], 56
    %48 = vst [vmem:[%s47] sm:%s3] %v46
    %s49 = smul.addr 4, 6
    %s50 = scalar_lea.vmem %s0, %s49
    %v51 = vld [vmem:[%s50] sm:%s3]
    %s52 = scalar_lea.vmem [#allocation0], 48
    %53 = vst [vmem:[%s52] sm:%s3] %v51
    %s54 = smul.addr 4, 5
    %s55 = scalar_lea.vmem %s0, %s54
    %v56 = vld [vmem:[%s55] sm:%s3]
    %s57 = scalar_lea.vmem [#allocation0], 40
    %58 = vst [vmem:[%s57] sm:%s3] %v56
    %s59 = smul.addr 4, 4
    %s60 = scalar_lea.vmem %s0, %s59
    %v61 = vld [vmem:[%s60] sm:%s3]
    %s62 = scalar_lea.vmem [#allocation0], 32
    %63 = vst [vmem:[%s62] sm:%s3] %v61
    %s64 = smul.addr 4, 3
    %s65 = scalar_lea.vmem %s0, %s64
    %v66 = vld [vmem:[%s65] sm:%s3]
    %s67 = scalar_lea.vmem [#allocation0], 24
    %68 = vst [vmem:[%s67] sm:%s3] %v66
    %s69 = smul.addr 4, 2
    %s70 = scalar_lea.vmem %s0, %s69
    %v71 = vld [vmem:[%s70] sm:%s3]
    %s72 = scalar_lea.vmem [#allocation0], 16
    %73 = vst [vmem:[%s72] sm:%s3] %v71
    %s74 = scalar_lea.vmem %s0, 4
    %v75 = vld [vmem:[%s74] sm:%s3]
    %s76 = scalar_lea.vmem [#allocation0], 8
    %77 = vst [vmem:[%s76] sm:%s3] %v75
    %v78 = vld [vmem:[%s0] sm:%s3]
    %79 = vst [vmem:[#allocation0] sm:%s3] %v78
    %v80 = vld [vmem:[#allocation0] sm:$0x7]
    %vm81 = vcmask 64512
    %82 = vst.msk [vmem:[%s1] sm:$0x7] %vm81, %v80
    %s83 = scalar_lea.vmem [#allocation0], 8
    %v84 = vld [vmem:[%s83] sm:$0x7]
    %vm85 = vcmask 64512
    %s86 = scalar_lea.vmem %s1, 3
    %87 = vst.msk [vmem:[%s86] sm:$0x7] %vm85, %v84
    %s88 = scalar_lea.vmem [#allocation0], 16
    %v89 = vld [vmem:[%s88] sm:$0x7]
    %vm90 = vcmask 64512
    %s91 = scalar_lea.vmem %s1, 6
    %92 = vst.msk [vmem:[%s91] sm:$0x7] %vm90, %v89
    %s93 = scalar_lea.vmem [#allocation0], 24
    %v94 = vld [vmem:[%s93] sm:$0x7]
    %vm95 = vcmask 64512
    %s96 = scalar_lea.vmem %s1, 9
    %97 = vst.msk [vmem:[%s96] sm:$0x7] %vm95, %v94
    %s98 = scalar_lea.vmem [#allocation0], 32
    %v99 = vld [vmem:[%s98] sm:$0x7]
    %vm100 = vcmask 64512
    %s101 = scalar_lea.vmem %s1, 12
    %102 = vst.msk [vmem:[%s101] sm:$0x7] %vm100, %v99
    %s103 = scalar_lea.vmem [#allocation0], 40
    %v104 = vld [vmem:[%s103] sm:$0x7]
    %vm105 = vcmask 64512
    %s106 = scalar_lea.vmem %s1, 15
    %107 = vst.msk [vmem:[%s106] sm:$0x7] %vm105, %v104
    %s108 = scalar_lea.vmem [#allocation0], 48
    %v109 = vld [vmem:[%s108] sm:$0x7]
    %vm110 = vcmask 64512
    %s111 = scalar_lea.vmem %s1, 18
    %112 = vst.msk [vmem:[%s111] sm:$0x7] %vm110, %v109
    %s113 = scalar_lea.vmem [#allocation0], 56
    %v114 = vld [vmem:[%s113] sm:$0x7]
    %vm115 = vcmask 64512
    %s116 = scalar_lea.vmem %s1, 21
    %117 = vst.msk [vmem:[%s116] sm:$0x7] %vm115, %v114
    %s118 = scalar_lea.vmem [#allocation0], 64
    %v119 = vld [vmem:[%s118] sm:$0x7]
    %vm120 = vcmask 64512
    %s121 = scalar_lea.vmem %s1, 24
    %122 = vst.msk [vmem:[%s121] sm:$0x7] %vm120, %v119
    %s123 = scalar_lea.vmem [#allocation0], 72
    %v124 = vld [vmem:[%s123] sm:$0x7]
    %vm125 = vcmask 64512
    %s126 = scalar_lea.vmem %s1, 27
    %127 = vst.msk [vmem:[%s126] sm:$0x7] %vm125, %v124
    %s128 = scalar_lea.vmem [#allocation0], 80
    %v129 = vld [vmem:[%s128] sm:$0x7]
    %vm130 = vcmask 64512
    %s131 = scalar_lea.vmem %s1, 30
    %132 = vst.msk [vmem:[%s131] sm:$0x7] %vm130, %v129
    %s133 = scalar_lea.vmem [#allocation0], 88
    %v134 = vld [vmem:[%s133] sm:$0x7]
    %vm135 = vcmask 64512
    %s136 = scalar_lea.vmem %s1, 33
    %137 = vst.msk [vmem:[%s136] sm:$0x7] %vm135, %v134
    %s138 = scalar_lea.vmem [#allocation0], 96
    %v139 = vld [vmem:[%s138] sm:$0x7]
    %vm140 = vcmask 64512
    %s141 = scalar_lea.vmem %s1, 36
    %142 = vst.msk [vmem:[%s141] sm:$0x7] %vm140, %v139
    %s143 = scalar_lea.vmem [#allocation0], 104
    %v144 = vld [vmem:[%s143] sm:$0x7]
    %vm145 = vcmask 64512
    %s146 = scalar_lea.vmem %s1, 39
    %147 = vst.msk [vmem:[%s146] sm:$0x7] %vm145, %v144
    %s148 = scalar_lea.vmem [#allocation0], 112
    %v149 = vld [vmem:[%s148] sm:$0x7]
    %vm150 = vcmask 64512
    %s151 = scalar_lea.vmem %s1, 42
    %152 = vst.msk [vmem:[%s151] sm:$0x7] %vm150, %v149
    %s153 = scalar_lea.vmem [#allocation0], 120
    %v154 = vld [vmem:[%s153] sm:$0x7]
    %vm155 = vcmask 64512
    %s156 = scalar_lea.vmem %s1, 45
    %157 = vst.msk [vmem:[%s156] sm:$0x7] %vm155, %v154

// kernel: tile.9
$region0: #{tile.9}
  %s0 = inlined_call_operand.vmem [shape: f32[16,8], index: 0, kind: input, shape index: {}]
  %s1 = inlined_call_operand.vmem [shape: f32[1,128], index: 1, kind: output, shape index: {}]
  $region1: #{tile.9} parent=0
    #allocation0 [shape = 'u8[4096]{0}', space=vmem, size = 0x1000, scoped, tag = 'scoped mem for output reshape']
    %v2 = vld [vmem:[%s0] sm:$0x1]
    %vm3 = vcmask 64512
    %4 = vst.msk [vmem:[#allocation0] sm:$0x1] %vm3, %v2
    %s5 = scalar_lea.vmem %s0, 15
    %v6 = vld [vmem:[%s5] sm:$0x1]
    %7 = vrot.lane.b32.xlu0 %v6, 120
    %v8 = vpop.permute.xlu0 %7
    %vm9 = vcmask 1048512
    %10 = vst.msk [vmem:[#allocation0] sm:$0x1] %vm9, %v8
    %s11 = scalar_lea.vmem %s0, 14
    %v12 = vld [vmem:[%s11] sm:$0x1]
    %13 = vrot.lane.b32.xlu0 %v12, 112
    %v14 = vpop.permute.xlu0 %13
    %vm15 = vcmask 982912
    %16 = vst.msk [vmem:[#allocation0] sm:$0x1] %vm15, %v14
    %s17 = scalar_lea.vmem %s0, 13
    %v18 = vld [vmem:[%s17] sm:$0x1]
    %19 = vrot.lane.b32.xlu0 %v18, 104
    %v20 = vpop.permute.xlu0 %19
    %vm21 = vcmask 917312
    %22 = vst.msk [vmem:[#allocation0] sm:$0x1] %vm21, %v20
    %s23 = scalar_lea.vmem %s0, 12
    %v24 = vld [vmem:[%s23] sm:$0x1]
    %25 = vrot.lane.b32.xlu0 %v24, 96
    %v26 = vpop.permute.xlu0 %25
    %vm27 = vcmask 851712
    %28 = vst.msk [vmem:[#allocation0] sm:$0x1] %vm27, %v26
    %s29 = scalar_lea.vmem %s0, 11
    %v30 = vld [vmem:[%s29] sm:$0x1]
    %31 = vrot.lane.b32.xlu0 %v30, 88
    %v32 = vpop.permute.xlu0 %31
    %vm33 = vcmask 786112
    %34 = vst.msk [vmem:[#allocation0] sm:$0x1] %vm33, %v32
    %s35 = scalar_lea.vmem %s0, 10
    %v36 = vld [vmem:[%s35] sm:$0x1]
    %37 = vrot.lane.b32.xlu0 %v36, 80
    %v38 = vpop.permute.xlu0 %37
    %vm39 = vcmask 720512
    %40 = vst.msk [vmem:[#allocation0] sm:$0x1] %vm39, %v38
    %s41 = scalar_lea.vmem %s0, 9
    %v42 = vld [vmem:[%s41] sm:$0x1]
    %43 = vrot.lane.b32.xlu0 %v42, 72
    %v44 = vpop.permute.xlu0 %43
    %vm45 = vcmask 654912
    %46 = vst.msk [vmem:[#allocation0] sm:$0x1] %vm45, %v44
    %s47 = scalar_lea.vmem %s0, 8
    %v48 = vld [vmem:[%s47] sm:$0x1]
    %49 = vrot.lane.b32.xlu0 %v48, 64
    %v50 = vpop.permute.xlu0 %49
    %vm51 = vcmask 589312
    %52 = vst.msk [vmem:[#allocation0] sm:$0x1] %vm51, %v50
    %s53 = scalar_lea.vmem %s0, 7
    %v54 = vld [vmem:[%s53] sm:$0x1]
    %55 = vrot.lane.b32.xlu0 %v54, 56
    %v56 = vpop.permute.xlu0 %55
    %vm57 = vcmask 523712
    %58 = vst.msk [vmem:[#allocation0] sm:$0x1] %vm57, %v56
    %s59 = scalar_lea.vmem %s0, 6
    %v60 = vld [vmem:[%s59] sm:$0x1]
    %61 = vrot.lane.b32.xlu0 %v60, 48
    %v62 = vpop.permute.xlu0 %61
    %vm63 = vcmask 458112
    %64 = vst.msk [vmem:[#allocation0] sm:$0x1] %vm63, %v62
    %s65 = scalar_lea.vmem %s0, 5
    %v66 = vld [vmem:[%s65] sm:$0x1]
    %67 = vrot.lane.b32.xlu0 %v66, 40
    %v68 = vpop.permute.xlu0 %67
    %vm69 = vcmask 392512
    %70 = vst.msk [vmem:[#allocation0] sm:$0x1] %vm69, %v68
    %s71 = scalar_lea.vmem %s0, 4
    %v72 = vld [vmem:[%s71] sm:$0x1]
    %73 = vrot.lane.b32.xlu0 %v72, 32
    %v74 = vpop.permute.xlu0 %73
    %vm75 = vcmask 326912
    %76 = vst.msk [vmem:[#allocation0] sm:$0x1] %vm75, %v74
    %s77 = scalar_lea.vmem %s0, 3
    %v78 = vld [vmem:[%s77] sm:$0x1]
    %79 = vrot.lane.b32.xlu0 %v78, 24
    %v80 = vpop.permute.xlu0 %79
    %vm81 = vcmask 261312
    %82 = vst.msk [vmem:[#allocation0] sm:$0x1] %vm81, %v80
    %s83 = scalar_lea.vmem %s0, 2
    %v84 = vld [vmem:[%s83] sm:$0x1]
    %85 = vrot.lane.b32.xlu0 %v84, 16
    %v86 = vpop.permute.xlu0 %85
    %vm87 = vcmask 195712
    %88 = vst.msk [vmem:[#allocation0] sm:$0x1] %vm87, %v86
    %s89 = scalar_lea.vmem %s0, 1
    %v90 = vld [vmem:[%s89] sm:$0x1]
    %91 = vrot.lane.b32.xlu0 %v90, 8
    %v92 = vpop.permute.xlu0 %91
    %vm93 = vcmask 130112
    %94 = vst.msk [vmem:[#allocation0] sm:$0x1] %vm93, %v92
    %s96 = sshllo.u32 0, 1
    %v98 = vld [vmem:[#allocation0] sm:%s96]
    %s99 = sshllo.u32 0, 1
    %100 = vst [vmem:[%s1] sm:%s99] %v98

// kernel: critic_forward.1
$region0: #{critic_forward.1}
  #allocation0 [shape = 'u32[]', space=smem, size = 0x4, offset = 0x4, fixed_abs, tag = 'smem constant byte address 0x4 - core index']
  #allocation1 [shape = 'u32[144,128]{1,0:T(1,128)}', space=vmem, size = 0x12000, scoped, tag = 'internal scratch']
  %s0 = inlined_call_operand.vmem [shape: bf16[2,128,768], index: 0, kind: input, shape index: {}]
  %s1 = inlined_call_operand.vmem [shape: bf16[768,128], index: 1, kind: input, shape index: {}]
  %s2 = inlined_call_operand.vmem [shape: f32[1,128], index: 2, kind: input, shape index: {}]
  %s3 = inlined_call_operand.vmem [shape: bf16[128,16], index: 3, kind: input, shape index: {}]
  %s4 = inlined_call_operand.vmem [shape: f32[1,16], index: 4, kind: input, shape index: {}]
  %s5 = inlined_call_operand.vmem [shape: bf16[16,16,128], index: 5, kind: input, shape index: {}]
  %s6 = inlined_call_operand.vmem [shape: f32[1,128], index: 6, kind: input, shape index: {}]
  %s7 = inlined_call_operand.vmem [shape: f32[2,8,128], index: 7, kind: output, shape index: {}]
  %s8 = sld [smem:[#allocation0]]
  $region61: #{critic_forward.1} parent=0
    _
  %s10 = ssub.s32 1, %s8
  %s11 = scalar_select 0, %s10, %s8
  loop: start=0, step=1, limit=4
  $region2: #{critic_forward.1} parent=0 // loop_pre_header
    _
  $region3: #{critic_forward.1} parent=0 // loop_header
    %s13 = sphi 0, %s17
    %p14 = scmp.ge.s32.totalorder %s13, 4
    %s23 = sphi 0, %s25
    %s26 = sphi 0, %s23
    %s27 = sphi 0, %s26
    %s43 = sphi 0, %s27
    %s47 = sphi 0, %s47
    %s49 = sphi 0, %s47
    %s50 = sphi 0, %s49
    %s64 = sphi 0, %s50
    %s68 = sphi 0, %s68
    %s70 = sphi 0, %s68
    %s71 = sphi 0, %s70
    %s85 = sphi 0, %s71
    %s89 = sphi 0, %s89
    %s91 = sphi 0, %s89
    %s92 = sphi 0, %s91
    %s106 = sphi 0, %s92
    %s110 = sphi 0, %s110
    %s112 = sphi 0, %s110
    %s113 = sphi 0, %s112
    %s127 = sphi 0, %s113
    %s131 = sphi 0, %s131
    %s133 = sphi 0, %s131
    %s134 = sphi 0, %s133
    %s148 = sphi 0, %s134
    %s152 = sphi 0, %s152
    %s154 = sphi 0, %s152
    %s155 = sphi 0, %s154
    %s169 = sphi 0, %s155
    %s175 = sphi 0, %s177
    %s178 = sphi 0, %s175
    %s179 = sphi 0, %s178
    %s195 = sphi 0, %s179
  $region4: #{critic_forward.1} parent=0 // loop_header_branch
    %16 = sbr.rel (%p14) target = $region8
  $region5: #{critic_forward.1} parent=0 // loop_body
    %s18 = ssub.s32 %s13, 1
    %s19 = ssub.s32 %s13, 2
    %s20 = sadd.s32 %s13, 1
    %s21 = ssub.s32 %s13, %s20
    %p22 = scmp.eq.s32.totalorder %s21, 0
    %s24 = sadd.s32 %s23, 1
    %s25 = scalar_select %p22, %s23, %s24
    %p28 = pneg %p22
    %p29 = scmp.eq.s32.totalorder %s13, 1
    %p30 = por %p28, %p29
    %p31 = scmp.ne.s32.totalorder %s23, %s26
    %p32 = scmp.eq.s32.totalorder %s13, 0
    %p33 = por %p31, %p32
    %p34 = scmp.ne.s32.totalorder %s23, %s26
    %p35 = scmp.eq.s32.totalorder %s18, 1
    %p36 = por %p34, %p35
    %p37 = scmp.ne.s32.totalorder %s26, %s27
    %p38 = scmp.eq.s32.totalorder %s18, 0
    %p39 = por %p37, %p38
    %p40 = scmp.ne.s32.totalorder %s26, %s27
    %p41 = scmp.eq.s32.totalorder %s19, 1
    %p42 = por %p40, %p41
    %p44 = scmp.ne.s32.totalorder %s27, %s43
    %p45 = scmp.eq.s32.totalorder %s19, 0
    %p46 = por %p44, %p45
    %s48 = sadd.s32 %s47, 1
    %p51 = scmp.eq.s32.totalorder %s13, 1
    %p52 = scmp.ne.s32.totalorder %s47, %s49
    %p53 = scmp.eq.s32.totalorder %s13, 0
    %p54 = por %p52, %p53
    %p55 = scmp.ne.s32.totalorder %s47, %s49
    %p56 = scmp.eq.s32.totalorder %s18, 1
    %p57 = por %p55, %p56
    %p58 = scmp.ne.s32.totalorder %s49, %s50
    %p59 = scmp.eq.s32.totalorder %s18, 0
    %p60 = por %p58, %p59
    %p61 = scmp.ne.s32.totalorder %s49, %s50
    %p62 = scmp.eq.s32.totalorder %s19, 1
    %p63 = por %p61, %p62
    %p65 = scmp.ne.s32.totalorder %s50, %s64
    %p66 = scmp.eq.s32.totalorder %s19, 0
    %p67 = por %p65, %p66
    %s69 = sadd.s32 %s68, 1
    %p72 = scmp.eq.s32.totalorder %s13, 1
    %p73 = scmp.ne.s32.totalorder %s68, %s70
    %p74 = scmp.eq.s32.totalorder %s13, 0
    %p75 = por %p73, %p74
    %p76 = scmp.ne.s32.totalorder %s68, %s70
    %p77 = scmp.eq.s32.totalorder %s18, 1
    %p78 = por %p76, %p77
    %p79 = scmp.ne.s32.totalorder %s70, %s71
    %p80 = scmp.eq.s32.totalorder %s18, 0
    %p81 = por %p79, %p80
    %p82 = scmp.ne.s32.totalorder %s70, %s71
    %p83 = scmp.eq.s32.totalorder %s19, 1
    %p84 = por %p82, %p83
    %p86 = scmp.ne.s32.totalorder %s71, %s85
    %p87 = scmp.eq.s32.totalorder %s19, 0
    %p88 = por %p86, %p87
    %s90 = sadd.s32 %s89, 1
    %p93 = scmp.eq.s32.totalorder %s13, 1
    %p94 = scmp.ne.s32.totalorder %s89, %s91
    %p95 = scmp.eq.s32.totalorder %s13, 0
    %p96 = por %p94, %p95
    %p97 = scmp.ne.s32.totalorder %s89, %s91
    %p98 = scmp.eq.s32.totalorder %s18, 1
    %p99 = por %p97, %p98
    %p100 = scmp.ne.s32.totalorder %s91, %s92
    %p101 = scmp.eq.s32.totalorder %s18, 0
    %p102 = por %p100, %p101
    %p103 = scmp.ne.s32.totalorder %s91, %s92
    %p104 = scmp.eq.s32.totalorder %s19, 1
    %p105 = por %p103, %p104
    %p107 = scmp.ne.s32.totalorder %s92, %s106
    %p108 = scmp.eq.s32.totalorder %s19, 0
    %p109 = por %p107, %p108
    %s111 = sadd.s32 %s110, 1
    %p114 = scmp.eq.s32.totalorder %s13, 1
    %p115 = scmp.ne.s32.totalorder %s110, %s112
    %p116 = scmp.eq.s32.totalorder %s13, 0
    %p117 = por %p115, %p116
    %p118 = scmp.ne.s32.totalorder %s110, %s112
    %p119 = scmp.eq.s32.totalorder %s18, 1
    %p120 = por %p118, %p119
    %p121 = scmp.ne.s32.totalorder %s112, %s113
    %p122 = scmp.eq.s32.totalorder %s18, 0
    %p123 = por %p121, %p122
    %p124 = scmp.ne.s32.totalorder %s112, %s113
    %p125 = scmp.eq.s32.totalorder %s19, 1
    %p126 = por %p124, %p125
    %p128 = scmp.ne.s32.totalorder %s113, %s127
    %p129 = scmp.eq.s32.totalorder %s19, 0
    %p130 = por %p128, %p129
    %s132 = sadd.s32 %s131, 1
    %p135 = scmp.eq.s32.totalorder %s13, 1
    %p136 = scmp.ne.s32.totalorder %s131, %s133
    %p137 = scmp.eq.s32.totalorder %s13, 0
    %p138 = por %p136, %p137
    %p139 = scmp.ne.s32.totalorder %s131, %s133
    %p140 = scmp.eq.s32.totalorder %s18, 1
    %p141 = por %p139, %p140
    %p142 = scmp.ne.s32.totalorder %s133, %s134
    %p143 = scmp.eq.s32.totalorder %s18, 0
    %p144 = por %p142, %p143
    %p145 = scmp.ne.s32.totalorder %s133, %s134
    %p146 = scmp.eq.s32.totalorder %s19, 1
    %p147 = por %p145, %p146
    %p149 = scmp.ne.s32.totalorder %s134, %s148
    %p150 = scmp.eq.s32.totalorder %s19, 0
    %p151 = por %p149, %p150
    %s153 = sadd.s32 %s152, 1
    %p156 = scmp.eq.s32.totalorder %s13, 1
    %p157 = scmp.ne.s32.totalorder %s152, %s154
    %p158 = scmp.eq.s32.totalorder %s13, 0
    %p159 = por %p157, %p158
    %p160 = scmp.ne.s32.totalorder %s152, %s154
    %p161 = scmp.eq.s32.totalorder %s18, 1
    %p162 = por %p160, %p161
    %p163 = scmp.ne.s32.totalorder %s154, %s155
    %p164 = scmp.eq.s32.totalorder %s18, 0
    %p165 = por %p163, %p164
    %p166 = scmp.ne.s32.totalorder %s154, %s155
    %p167 = scmp.eq.s32.totalorder %s19, 1
    %p168 = por %p166, %p167
    %p170 = scmp.ne.s32.totalorder %s155, %s169
    %p171 = scmp.eq.s32.totalorder %s19, 0
    %p172 = por %p170, %p171
    %s173 = ssub.s32 %s13, %s20
    %p174 = scmp.eq.s32.totalorder %s173, 0
    %s176 = sadd.s32 %s175, 1
    %s177 = scalar_select %p174, %s175, %s176
    %p180 = pneg %p174
    %p181 = scmp.eq.s32.totalorder %s13, 1
    %p182 = por %p180, %p181
    %p183 = scmp.ne.s32.totalorder %s175, %s178
    %p184 = scmp.eq.s32.totalorder %s13, 0
    %p185 = por %p183, %p184
    %p186 = scmp.ne.s32.totalorder %s175, %s178
    %p187 = scmp.eq.s32.totalorder %s18, 1
    %p188 = por %p186, %p187
    %p189 = scmp.ne.s32.totalorder %s178, %s179
    %p190 = scmp.eq.s32.totalorder %s18, 0
    %p191 = por %p189, %p190
    %p192 = scmp.ne.s32.totalorder %s178, %s179
    %p193 = scmp.eq.s32.totalorder %s19, 1
    %p194 = por %p192, %p193
    %p196 = scmp.ne.s32.totalorder %s179, %s195
    %p197 = scmp.eq.s32.totalorder %s19, 0
    %p198 = por %p196, %p197
    %p199 = scmp.le.s32.totalorder 1, %s13
    %p200 = scmp.lt.s32.totalorder %s13, 3
    %p201 = pnand %p199, %p200
    %p202 = pneg %p201
    // Predicated region
    $region9: #{critic_forward.1} parent=5 // pred_check
      _
    $region10: #{critic_forward.1} parent=5 // pred_check_branch
      %204 = sbr.rel (%p201) target = $region12
    $region11: #{critic_forward.1} parent=5 // pred_region
      %s205 = ssub.s32 %s13, 1
      // Predicated region
      $region13: #{critic_forward.1} parent=11 // pred_check
        %p206 = pneg %p60
      $region14: #{critic_forward.1} parent=11 // pred_check_branch
        %208 = sbr.rel (%p206) target = $region16
      $region15: #{critic_forward.1} parent=11 // pred_region
        _
      $region16: #{critic_forward.1} parent=11 // pred_fallthru
        _
      // Predicated region
      $region17: #{critic_forward.1} parent=11 // pred_check
        %p209 = pneg %p81
      $region18: #{critic_forward.1} parent=11 // pred_check_branch
        %211 = sbr.rel (%p209) target = $region20
      $region19: #{critic_forward.1} parent=11 // pred_region
        _
      $region20: #{critic_forward.1} parent=11 // pred_fallthru
        _
      // Predicated region
      $region21: #{critic_forward.1} parent=11 // pred_check
        %p212 = pneg %p102
      $region22: #{critic_forward.1} parent=11 // pred_check_branch
        %214 = sbr.rel (%p212) target = $region24
      $region23: #{critic_forward.1} parent=11 // pred_region
        _
      $region24: #{critic_forward.1} parent=11 // pred_fallthru
        _
      // Predicated region
      $region25: #{critic_forward.1} parent=11 // pred_check
        %p215 = pneg %p123
      $region26: #{critic_forward.1} parent=11 // pred_check_branch
        %217 = sbr.rel (%p215) target = $region28
      $region27: #{critic_forward.1} parent=11 // pred_region
        _
      $region28: #{critic_forward.1} parent=11 // pred_fallthru
        _
      // Predicated region
      $region29: #{critic_forward.1} parent=11 // pred_check
        %p218 = pneg %p144
      $region30: #{critic_forward.1} parent=11 // pred_check_branch
        %220 = sbr.rel (%p218) target = $region32
      $region31: #{critic_forward.1} parent=11 // pred_region
        _
      $region32: #{critic_forward.1} parent=11 // pred_fallthru
        _
      // Predicated region
      $region33: #{critic_forward.1} parent=11 // pred_check
        %p221 = pneg %p165
      $region34: #{critic_forward.1} parent=11 // pred_check_branch
        %223 = sbr.rel (%p221) target = $region36
      $region35: #{critic_forward.1} parent=11 // pred_region
        _
      $region36: #{critic_forward.1} parent=11 // pred_fallthru
        _
    $region12: #{critic_forward.1} parent=5 // pred_fallthru
      _
    %p224 = scmp.lt.s32.totalorder %s13, 2
    // Predicated region
    $region37: #{critic_forward.1} parent=5 // pred_check
      %p225 = pneg %p224
    $region38: #{critic_forward.1} parent=5 // pred_check_branch
      %227 = sbr.rel (%p225) target = $region40
    $region39: #{critic_forward.1} parent=5 // pred_region
      // Predicated region
      $region41: #{critic_forward.1} parent=39 // pred_check
        %p228 = pneg %p33
      $region42: #{critic_forward.1} parent=39 // pred_check_branch
        %230 = sbr.rel (%p228) target = $region44
      $region43: #{critic_forward.1} parent=39 // pred_region
        %p231 = scmp.lt.s32.totalorder %s13, 1
        %s232 = scalar_select %p231, %s13, 1
        %s233 = smul.addr %s232, 96
        %s234 = smul.addr %s233, 4
        %s235 = scalar_lea.vmem %s0, %s234
      $region44: #{critic_forward.1} parent=39 // pred_fallthru
        _
    $region40: #{critic_forward.1} parent=5 // pred_fallthru
      _
    %p236 = scmp.le.s32.totalorder 1, %s13
    %p237 = scmp.lt.s32.totalorder %s13, 3
    %p238 = pnand %p236, %p237
    %p239 = pneg %p238
    // Predicated region
    $region45: #{critic_forward.1} parent=5 // pred_check
      _
    $region46: #{critic_forward.1} parent=5 // pred_check_branch
      %241 = sbr.rel (%p238) target = $region48
    $region47: #{critic_forward.1} parent=5 // pred_region
      %s242 = ssub.s32 %s13, 1
      %p243 = scmp.lt.s32.totalorder %s18, 1
      %s244 = scalar_select %p243, %s18, 1
      %s245 = smul.addr %s244, 96
      %s246 = smul.addr %s245, 4
      %s247 = scalar_lea.vmem %s0, %s246
      %p248 = pneg %p39
      %p249 = pneg %p36
      %p250 = pneg %p60
      %p251 = pneg %p57
      %p252 = pneg %p81
      %p253 = pneg %p78
      %p254 = pneg %p102
      %p255 = pneg %p99
      %p256 = pneg %p123
      %p257 = pneg %p120
      %p258 = pneg %p144
      %p259 = pneg %p141
      %p260 = pneg %p165
      %p261 = pneg %p162
      %p262 = pneg %p191
      %p263 = pneg %p188
      %p264 = scmp.lt.s32.totalorder %s18, 1
      %s265 = scalar_select %p264, %s18, 1
      %s266 = smul.addr %s265, 8
      %s267 = scalar_lea.vmem %s7, %s266
      %p268 = scmp.lt.s32.totalorder %s18, 1
      %s269 = scalar_select %p268, %s18, 1
      %s270 = smul.addr %s269, 96
      %s271 = smul.addr %s270, 4
      %s272 = scalar_lea.vmem %s0, %s271
      %p273 = scmp.lt.s32.totalorder %s18, 1
      %s274 = scalar_select %p273, %s18, 1
      %s275 = smul.addr %s274, 8
      %s276 = scalar_lea.vmem %s7, %s275
      %v278 = vld [vmem:[%s272] sm:$0xff]
      %v279 = vld [vmem:[%s272 + $0x8] sm:$0xff]
      %v280 = vld [vmem:[%s272 + $0x10] sm:$0xff]
      %v281 = vld [vmem:[%s272 + $0x18] sm:$0xff]
      %v282 = vld [vmem:[%s272 + $0x20] sm:$0xff]
      %v283 = vld [vmem:[%s272 + $0x28] sm:$0xff]
      %v284 = vld [vmem:[%s272 + $0x30] sm:$0xff]
      %v285 = vld [vmem:[%s272 + $0x38] sm:$0xff]
      %v286 = vld [vmem:[%s272 + $0x40] sm:$0xff]
      %v287 = vld [vmem:[%s272 + $0x48] sm:$0xff]
      %v288 = vld [vmem:[%s272 + $0x50] sm:$0xff]
      %v289 = vld [vmem:[%s272 + $0x58] sm:$0xff]
      %v290 = vld [vmem:[%s272 + $0x60] sm:$0xff]
      %v291 = vld [vmem:[%s272 + $0x68] sm:$0xff]
      %v292 = vld [vmem:[%s272 + $0x70] sm:$0xff]
      %v293 = vld [vmem:[%s272 + $0x78] sm:$0xff]
      %v294 = vld [vmem:[%s272 + $0x80] sm:$0xff]
      %v295 = vld [vmem:[%s272 + $0x88] sm:$0xff]
      %v296 = vld [vmem:[%s272 + $0x90] sm:$0xff]
      %v297 = vld [vmem:[%s272 + $0x98] sm:$0xff]
      %v298 = vld [vmem:[%s272 + $0xa0] sm:$0xff]
      %v299 = vld [vmem:[%s272 + $0xa8] sm:$0xff]
      %v300 = vld [vmem:[%s272 + $0xb0] sm:$0xff]
      %v301 = vld [vmem:[%s272 + $0xb8] sm:$0xff]
      %v302 = vld [vmem:[%s272 + $0xc0] sm:$0xff]
      %v303 = vld [vmem:[%s272 + $0xc8] sm:$0xff]
      %v304 = vld [vmem:[%s272 + $0xd0] sm:$0xff]
      %v305 = vld [vmem:[%s272 + $0xd8] sm:$0xff]
      %v306 = vld [vmem:[%s272 + $0xe0] sm:$0xff]
      %v307 = vld [vmem:[%s272 + $0xe8] sm:$0xff]
      %v308 = vld [vmem:[%s272 + $0xf0] sm:$0xff]
      %v309 = vld [vmem:[%s272 + $0xf8] sm:$0xff]
      %v310 = vld [vmem:[%s272 + $0x100] sm:$0xff]
      %v311 = vld [vmem:[%s272 + $0x108] sm:$0xff]
      %v312 = vld [vmem:[%s272 + $0x110] sm:$0xff]
      %v313 = vld [vmem:[%s272 + $0x118] sm:$0xff]
      %v314 = vld [vmem:[%s272 + $0x120] sm:$0xff]
      %v315 = vld [vmem:[%s272 + $0x128] sm:$0xff]
      %v316 = vld [vmem:[%s272 + $0x130] sm:$0xff]
      %v317 = vld [vmem:[%s272 + $0x138] sm:$0xff]
      %v318 = vld [vmem:[%s272 + $0x140] sm:$0xff]
      %v319 = vld [vmem:[%s272 + $0x148] sm:$0xff]
      %v320 = vld [vmem:[%s272 + $0x150] sm:$0xff]
      %v321 = vld [vmem:[%s272 + $0x158] sm:$0xff]
      %v322 = vld [vmem:[%s272 + $0x160] sm:$0xff]
      %v323 = vld [vmem:[%s272 + $0x168] sm:$0xff]
      %v324 = vld [vmem:[%s272 + $0x170] sm:$0xff]
      %v325 = vld [vmem:[%s272 + $0x178] sm:$0xff]
      %v326 = vld [vmem:[%s1] sm:$0xf]
      %v327 = vld [vmem:[%s1 + $0x4] sm:$0xf]
      %v328 = vld [vmem:[%s1 + $0x8] sm:$0xf]
      %v329 = vld [vmem:[%s1 + $0xc] sm:$0xf]
      %v330 = vld [vmem:[%s1 + $0x10] sm:$0xf]
      %v331 = vld [vmem:[%s1 + $0x14] sm:$0xf]
      %v332 = vld [vmem:[%s1 + $0x18] sm:$0xf]
      %v333 = vld [vmem:[%s1 + $0x1c] sm:$0xf]
      %v334 = vld [vmem:[%s1 + $0x20] sm:$0xf]
      %v335 = vld [vmem:[%s1 + $0x24] sm:$0xf]
      %v336 = vld [vmem:[%s1 + $0x28] sm:$0xf]
      %v337 = vld [vmem:[%s1 + $0x2c] sm:$0xf]
      %v338 = vld [vmem:[%s1 + $0x30] sm:$0xf]
      %v339 = vld [vmem:[%s1 + $0x34] sm:$0xf]
      %v340 = vld [vmem:[%s1 + $0x38] sm:$0xf]
      %v341 = vld [vmem:[%s1 + $0x3c] sm:$0xf]
      %v342 = vld [vmem:[%s1 + $0x40] sm:$0xf]
      %v343 = vld [vmem:[%s1 + $0x44] sm:$0xf]
      %v344 = vld [vmem:[%s1 + $0x48] sm:$0xf]
      %v345 = vld [vmem:[%s1 + $0x4c] sm:$0xf]
      %v346 = vld [vmem:[%s1 + $0x50] sm:$0xf]
      %v347 = vld [vmem:[%s1 + $0x54] sm:$0xf]
      %v348 = vld [vmem:[%s1 + $0x58] sm:$0xf]
      %v349 = vld [vmem:[%s1 + $0x5c] sm:$0xf]
      %v350 = vld [vmem:[%s1 + $0x60] sm:$0xf]
      %v351 = vld [vmem:[%s1 + $0x64] sm:$0xf]
      %v352 = vld [vmem:[%s1 + $0x68] sm:$0xf]
      %v353 = vld [vmem:[%s1 + $0x6c] sm:$0xf]
      %v354 = vld [vmem:[%s1 + $0x70] sm:$0xf]
      %v355 = vld [vmem:[%s1 + $0x74] sm:$0xf]
      %v356 = vld [vmem:[%s1 + $0x78] sm:$0xf]
      %v357 = vld [vmem:[%s1 + $0x7c] sm:$0xf]
      %v358 = vld [vmem:[%s1 + $0x80] sm:$0xf]
      %v359 = vld [vmem:[%s1 + $0x84] sm:$0xf]
      %v360 = vld [vmem:[%s1 + $0x88] sm:$0xf]
      %v361 = vld [vmem:[%s1 + $0x8c] sm:$0xf]
      %v362 = vld [vmem:[%s1 + $0x90] sm:$0xf]
      %v363 = vld [vmem:[%s1 + $0x94] sm:$0xf]
      %v364 = vld [vmem:[%s1 + $0x98] sm:$0xf]
      %v365 = vld [vmem:[%s1 + $0x9c] sm:$0xf]
      %v366 = vld [vmem:[%s1 + $0xa0] sm:$0xf]
      %v367 = vld [vmem:[%s1 + $0xa4] sm:$0xf]
      %v368 = vld [vmem:[%s1 + $0xa8] sm:$0xf]
      %v369 = vld [vmem:[%s1 + $0xac] sm:$0xf]
      %v370 = vld [vmem:[%s1 + $0xb0] sm:$0xf]
      %v371 = vld [vmem:[%s1 + $0xb4] sm:$0xf]
      %v372 = vld [vmem:[%s1 + $0xb8] sm:$0xf]
      %v373 = vld [vmem:[%s1 + $0xbc] sm:$0xf]
      %v374 = vld [vmem:[%s1 + $0xc0] sm:$0xf]
      %v375 = vld [vmem:[%s1 + $0xc4] sm:$0xf]
      %v376 = vld [vmem:[%s1 + $0xc8] sm:$0xf]
      %v377 = vld [vmem:[%s1 + $0xcc] sm:$0xf]
      %v378 = vld [vmem:[%s1 + $0xd0] sm:$0xf]
      %v379 = vld [vmem:[%s1 + $0xd4] sm:$0xf]
      %v380 = vld [vmem:[%s1 + $0xd8] sm:$0xf]
      %v381 = vld [vmem:[%s1 + $0xdc] sm:$0xf]
      %v382 = vld [vmem:[%s1 + $0xe0] sm:$0xf]
      %v383 = vld [vmem:[%s1 + $0xe4] sm:$0xf]
      %v384 = vld [vmem:[%s1 + $0xe8] sm:$0xf]
      %v385 = vld [vmem:[%s1 + $0xec] sm:$0xf]
      %v386 = vld [vmem:[%s1 + $0xf0] sm:$0xf]
      %v387 = vld [vmem:[%s1 + $0xf4] sm:$0xf]
      %v388 = vld [vmem:[%s1 + $0xf8] sm:$0xf]
      %v389 = vld [vmem:[%s1 + $0xfc] sm:$0xf]
      %v390 = vld [vmem:[%s1 + $0x100] sm:$0xf]
      %v391 = vld [vmem:[%s1 + $0x104] sm:$0xf]
      %v392 = vld [vmem:[%s1 + $0x108] sm:$0xf]
      %v393 = vld [vmem:[%s1 + $0x10c] sm:$0xf]
      %v394 = vld [vmem:[%s1 + $0x110] sm:$0xf]
      %v395 = vld [vmem:[%s1 + $0x114] sm:$0xf]
      %v396 = vld [vmem:[%s1 + $0x118] sm:$0xf]
      %v397 = vld [vmem:[%s1 + $0x11c] sm:$0xf]
      %v398 = vld [vmem:[%s1 + $0x120] sm:$0xf]
      %v399 = vld [vmem:[%s1 + $0x124] sm:$0xf]
      %v400 = vld [vmem:[%s1 + $0x128] sm:$0xf]
      %v401 = vld [vmem:[%s1 + $0x12c] sm:$0xf]
      %v402 = vld [vmem:[%s1 + $0x130] sm:$0xf]
      %v403 = vld [vmem:[%s1 + $0x134] sm:$0xf]
      %v404 = vld [vmem:[%s1 + $0x138] sm:$0xf]
      %v405 = vld [vmem:[%s1 + $0x13c] sm:$0xf]
      %v406 = vld [vmem:[%s1 + $0x140] sm:$0xf]
      %v407 = vld [vmem:[%s1 + $0x144] sm:$0xf]
      %v408 = vld [vmem:[%s1 + $0x148] sm:$0xf]
      %v409 = vld [vmem:[%s1 + $0x14c] sm:$0xf]
      %v410 = vld [vmem:[%s1 + $0x150] sm:$0xf]
      %v411 = vld [vmem:[%s1 + $0x154] sm:$0xf]
      %v412 = vld [vmem:[%s1 + $0x158] sm:$0xf]
      %v413 = vld [vmem:[%s1 + $0x15c] sm:$0xf]
      %v414 = vld [vmem:[%s1 + $0x160] sm:$0xf]
      %v415 = vld [vmem:[%s1 + $0x164] sm:$0xf]
      %v416 = vld [vmem:[%s1 + $0x168] sm:$0xf]
      %v417 = vld [vmem:[%s1 + $0x16c] sm:$0xf]
      %v418 = vld [vmem:[%s1 + $0x170] sm:$0xf]
      %v419 = vld [vmem:[%s1 + $0x174] sm:$0xf]
      %v420 = vld [vmem:[%s1 + $0x178] sm:$0xf]
      %v421 = vld [vmem:[%s1 + $0x17c] sm:$0xf]
      %v422 = vld [vmem:[%s2] sm:$0x1]
      %v424 = vlaneseq
      %v425 = vshrl.u32 %v424, 7
      %v426 = vsub.s32 0, %v425
      %v427 = vrot.slane %v422, %v426
      %v477 = vunpack.c.l.b16 %v278
      %v478 = vunpack.c.h.b16 %v278
      %v479 = vunpack.c.l.b16 %v279
      %v480 = vunpack.c.h.b16 %v279
      %v481 = vunpack.c.l.b16 %v280
      %v482 = vunpack.c.h.b16 %v280
      %v483 = vunpack.c.l.b16 %v281
      %v484 = vunpack.c.h.b16 %v281
      %v485 = vunpack.c.l.b16 %v282
      %v486 = vunpack.c.h.b16 %v282
      %v487 = vunpack.c.l.b16 %v283
      %v488 = vunpack.c.h.b16 %v283
      %v489 = vunpack.c.l.b16 %v284
      %v490 = vunpack.c.h.b16 %v284
      %v491 = vunpack.c.l.b16 %v285
      %v492 = vunpack.c.h.b16 %v285
      %v493 = vunpack.c.l.b16 %v286
      %v494 = vunpack.c.h.b16 %v286
      %v495 = vunpack.c.l.b16 %v287
      %v496 = vunpack.c.h.b16 %v287
      %v497 = vunpack.c.l.b16 %v288
      %v498 = vunpack.c.h.b16 %v288
      %v499 = vunpack.c.l.b16 %v289
      %v500 = vunpack.c.h.b16 %v289
      %v501 = vunpack.c.l.b16 %v290
      %v502 = vunpack.c.h.b16 %v290
      %v503 = vunpack.c.l.b16 %v291
      %v504 = vunpack.c.h.b16 %v291
      %v505 = vunpack.c.l.b16 %v292
      %v506 = vunpack.c.h.b16 %v292
      %v507 = vunpack.c.l.b16 %v293
      %v508 = vunpack.c.h.b16 %v293
      %v509 = vunpack.c.l.b16 %v294
      %v510 = vunpack.c.h.b16 %v294
      %v511 = vunpack.c.l.b16 %v295
      %v512 = vunpack.c.h.b16 %v295
      %v513 = vunpack.c.l.b16 %v296
      %v514 = vunpack.c.h.b16 %v296
      %v515 = vunpack.c.l.b16 %v297
      %v516 = vunpack.c.h.b16 %v297
      %v517 = vunpack.c.l.b16 %v298
      %v518 = vunpack.c.h.b16 %v298
      %v519 = vunpack.c.l.b16 %v299
      %v520 = vunpack.c.h.b16 %v299
      %v521 = vunpack.c.l.b16 %v300
      %v522 = vunpack.c.h.b16 %v300
      %v523 = vunpack.c.l.b16 %v301
      %v524 = vunpack.c.h.b16 %v301
      %v525 = vunpack.c.l.b16 %v302
      %v526 = vunpack.c.h.b16 %v302
      %v527 = vunpack.c.l.b16 %v303
      %v528 = vunpack.c.h.b16 %v303
      %v529 = vunpack.c.l.b16 %v304
      %v530 = vunpack.c.h.b16 %v304
      %v531 = vunpack.c.l.b16 %v305
      %v532 = vunpack.c.h.b16 %v305
      %v533 = vunpack.c.l.b16 %v306
      %v534 = vunpack.c.h.b16 %v306
      %v535 = vunpack.c.l.b16 %v307
      %v536 = vunpack.c.h.b16 %v307
      %v537 = vunpack.c.l.b16 %v308
      %v538 = vunpack.c.h.b16 %v308
      %v539 = vunpack.c.l.b16 %v309
      %v540 = vunpack.c.h.b16 %v309
      %v541 = vunpack.c.l.b16 %v310
      %v542 = vunpack.c.h.b16 %v310
      %v543 = vunpack.c.l.b16 %v311
      %v544 = vunpack.c.h.b16 %v311
      %v545 = vunpack.c.l.b16 %v312
      %v546 = vunpack.c.h.b16 %v312
      %v547 = vunpack.c.l.b16 %v313
      %v548 = vunpack.c.h.b16 %v313
      %v549 = vunpack.c.l.b16 %v314
      %v550 = vunpack.c.h.b16 %v314
      %v551 = vunpack.c.l.b16 %v315
      %v552 = vunpack.c.h.b16 %v315
      %v553 = vunpack.c.l.b16 %v316
      %v554 = vunpack.c.h.b16 %v316
      %v555 = vunpack.c.l.b16 %v317
      %v556 = vunpack.c.h.b16 %v317
      %v557 = vunpack.c.l.b16 %v318
      %v558 = vunpack.c.h.b16 %v318
      %v559 = vunpack.c.l.b16 %v319
      %v560 = vunpack.c.h.b16 %v319
      %v561 = vunpack.c.l.b16 %v320
      %v562 = vunpack.c.h.b16 %v320
      %v563 = vunpack.c.l.b16 %v321
      %v564 = vunpack.c.h.b16 %v321
      %v565 = vunpack.c.l.b16 %v322
      %v566 = vunpack.c.h.b16 %v322
      %v567 = vunpack.c.l.b16 %v323
      %v568 = vunpack.c.h.b16 %v323
      %v569 = vunpack.c.l.b16 %v324
      %v570 = vunpack.c.h.b16 %v324
      %v571 = vunpack.c.l.b16 %v325
      %v572 = vunpack.c.h.b16 %v325
      %v573 = vpack.c.b16 %v483, %v477
      %v574 = vpack.c.b16 %v484, %v478
      %v575 = vpack.c.b16 %v485, %v479
      %v576 = vpack.c.b16 %v486, %v480
      %v577 = vpack.c.b16 %v487, %v481
      %v578 = vpack.c.b16 %v488, %v482
      %v579 = vpack.c.b16 %v495, %v489
      %v580 = vpack.c.b16 %v496, %v490
      %v581 = vpack.c.b16 %v497, %v491
      %v582 = vpack.c.b16 %v498, %v492
      %v583 = vpack.c.b16 %v499, %v493
      %v584 = vpack.c.b16 %v500, %v494
      %v585 = vpack.c.b16 %v507, %v501
      %v586 = vpack.c.b16 %v508, %v502
      %v587 = vpack.c.b16 %v509, %v503
      %v588 = vpack.c.b16 %v510, %v504
      %v589 = vpack.c.b16 %v511, %v505
      %v590 = vpack.c.b16 %v512, %v506
      %v591 = vpack.c.b16 %v519, %v513
      %v592 = vpack.c.b16 %v520, %v514
      %v593 = vpack.c.b16 %v521, %v515
      %v594 = vpack.c.b16 %v522, %v516
      %v595 = vpack.c.b16 %v523, %v517
      %v596 = vpack.c.b16 %v524, %v518
      %v597 = vpack.c.b16 %v531, %v525
      %v598 = vpack.c.b16 %v532, %v526
      %v599 = vpack.c.b16 %v533, %v527
      %v600 = vpack.c.b16 %v534, %v528
      %v601 = vpack.c.b16 %v535, %v529
      %v602 = vpack.c.b16 %v536, %v530
      %v603 = vpack.c.b16 %v543, %v537
      %v604 = vpack.c.b16 %v544, %v538
      %v605 = vpack.c.b16 %v545, %v539
      %v606 = vpack.c.b16 %v546, %v540
      %v607 = vpack.c.b16 %v547, %v541
      %v608 = vpack.c.b16 %v548, %v542
      %v609 = vpack.c.b16 %v555, %v549
      %v610 = vpack.c.b16 %v556, %v550
      %v611 = vpack.c.b16 %v557, %v551
      %v612 = vpack.c.b16 %v558, %v552
      %v613 = vpack.c.b16 %v559, %v553
      %v614 = vpack.c.b16 %v560, %v554
      %v615 = vpack.c.b16 %v567, %v561
      %v616 = vpack.c.b16 %v568, %v562
      %v617 = vpack.c.b16 %v569, %v563
      %v618 = vpack.c.b16 %v570, %v564
      %v619 = vpack.c.b16 %v571, %v565
      %v620 = vpack.c.b16 %v572, %v566
      %v765 = vunpack.c.l.b16 %v326
      %v766 = vunpack.c.l.b16 %v327
      %v767 = vunpack.c.l.b16 %v328
      %v768 = vunpack.c.l.b16 %v329
      %v769 = vunpack.c.l.b16 %v330
      %v770 = vunpack.c.l.b16 %v331
      %v771 = vunpack.c.l.b16 %v332
      %v772 = vunpack.c.l.b16 %v333
      %v773 = vunpack.c.l.b16 %v334
      %v774 = vunpack.c.l.b16 %v335
      %v775 = vunpack.c.l.b16 %v336
      %v776 = vunpack.c.l.b16 %v337
      %v777 = vunpack.c.l.b16 %v338
      %v778 = vunpack.c.l.b16 %v339
      %v779 = vunpack.c.l.b16 %v340
      %v780 = vunpack.c.l.b16 %v341
      %v781 = vunpack.c.l.b16 %v342
      %v782 = vunpack.c.l.b16 %v343
      %v783 = vunpack.c.l.b16 %v344
      %v784 = vunpack.c.l.b16 %v345
      %v785 = vunpack.c.l.b16 %v346
      %v786 = vunpack.c.l.b16 %v347
      %v787 = vunpack.c.l.b16 %v348
      %v788 = vunpack.c.l.b16 %v349
      %v789 = vunpack.c.l.b16 %v350
      %v790 = vunpack.c.l.b16 %v351
      %v791 = vunpack.c.l.b16 %v352
      %v792 = vunpack.c.l.b16 %v353
      %v793 = vunpack.c.l.b16 %v354
      %v794 = vunpack.c.l.b16 %v355
      %v795 = vunpack.c.l.b16 %v356
      %v796 = vunpack.c.l.b16 %v357
      %v797 = vunpack.c.l.b16 %v358
      %v798 = vunpack.c.l.b16 %v359
      %v799 = vunpack.c.l.b16 %v360
      %v800 = vunpack.c.l.b16 %v361
      %v801 = vunpack.c.l.b16 %v362
      %v802 = vunpack.c.l.b16 %v363
      %v803 = vunpack.c.l.b16 %v364
      %v804 = vunpack.c.l.b16 %v365
      %v805 = vunpack.c.l.b16 %v366
      %v806 = vunpack.c.l.b16 %v367
      %v807 = vunpack.c.l.b16 %v368
      %v808 = vunpack.c.l.b16 %v369
      %v809 = vunpack.c.l.b16 %v370
      %v810 = vunpack.c.l.b16 %v371
      %v811 = vunpack.c.l.b16 %v372
      %v812 = vunpack.c.l.b16 %v373
      %v813 = vunpack.c.l.b16 %v374
      %v814 = vunpack.c.l.b16 %v375
      %v815 = vunpack.c.l.b16 %v376
      %v816 = vunpack.c.l.b16 %v377
      %v817 = vunpack.c.l.b16 %v378
      %v818 = vunpack.c.l.b16 %v379
      %v819 = vunpack.c.l.b16 %v380
      %v820 = vunpack.c.l.b16 %v381
      %v821 = vunpack.c.l.b16 %v382
      %v822 = vunpack.c.l.b16 %v383
      %v823 = vunpack.c.l.b16 %v384
      %v824 = vunpack.c.l.b16 %v385
      %v825 = vunpack.c.l.b16 %v386
      %v826 = vunpack.c.l.b16 %v387
      %v827 = vunpack.c.l.b16 %v388
      %v828 = vunpack.c.l.b16 %v389
      %v829 = vunpack.c.l.b16 %v390
      %v830 = vunpack.c.l.b16 %v391
      %v831 = vunpack.c.l.b16 %v392
      %v832 = vunpack.c.l.b16 %v393
      %v833 = vunpack.c.l.b16 %v394
      %v834 = vunpack.c.l.b16 %v395
      %v835 = vunpack.c.l.b16 %v396
      %v836 = vunpack.c.l.b16 %v397
      %v837 = vunpack.c.l.b16 %v398
      %v838 = vunpack.c.l.b16 %v399
      %v839 = vunpack.c.l.b16 %v400
      %v840 = vunpack.c.l.b16 %v401
      %v841 = vunpack.c.l.b16 %v402
      %v842 = vunpack.c.l.b16 %v403
      %v843 = vunpack.c.l.b16 %v404
      %v844 = vunpack.c.l.b16 %v405
      %v845 = vunpack.c.l.b16 %v406
      %v846 = vunpack.c.l.b16 %v407
      %v847 = vunpack.c.l.b16 %v408
      %v848 = vunpack.c.l.b16 %v409
      %v849 = vunpack.c.l.b16 %v410
      %v850 = vunpack.c.l.b16 %v411
      %v851 = vunpack.c.l.b16 %v412
      %v852 = vunpack.c.l.b16 %v413
      %v853 = vunpack.c.l.b16 %v414
      %v854 = vunpack.c.l.b16 %v415
      %v855 = vunpack.c.l.b16 %v416
      %v856 = vunpack.c.l.b16 %v417
      %v857 = vunpack.c.l.b16 %v418
      %v858 = vunpack.c.l.b16 %v419
      %v859 = vunpack.c.l.b16 %v420
      %v860 = vunpack.c.l.b16 %v421
      %v861 = vpack.c.b16 %v766, %v765
      %v862 = vpack.c.b16 %v768, %v767
      %v863 = vpack.c.b16 %v770, %v769
      %v864 = vpack.c.b16 %v772, %v771
      %v865 = vpack.c.b16 %v774, %v773
      %v866 = vpack.c.b16 %v776, %v775
      %v867 = vpack.c.b16 %v778, %v777
      %v868 = vpack.c.b16 %v780, %v779
      %v869 = vpack.c.b16 %v782, %v781
      %v870 = vpack.c.b16 %v784, %v783
      %v871 = vpack.c.b16 %v786, %v785
      %v872 = vpack.c.b16 %v788, %v787
      %v873 = vpack.c.b16 %v790, %v789
      %v874 = vpack.c.b16 %v792, %v791
      %v875 = vpack.c.b16 %v794, %v793
      %v876 = vpack.c.b16 %v796, %v795
      %v877 = vpack.c.b16 %v798, %v797
      %v878 = vpack.c.b16 %v800, %v799
      %v879 = vpack.c.b16 %v802, %v801
      %v880 = vpack.c.b16 %v804, %v803
      %v881 = vpack.c.b16 %v806, %v805
      %v882 = vpack.c.b16 %v808, %v807
      %v883 = vpack.c.b16 %v810, %v809
      %v884 = vpack.c.b16 %v812, %v811
      %v885 = vpack.c.b16 %v814, %v813
      %v886 = vpack.c.b16 %v816, %v815
      %v887 = vpack.c.b16 %v818, %v817
      %v888 = vpack.c.b16 %v820, %v819
      %v889 = vpack.c.b16 %v822, %v821
      %v890 = vpack.c.b16 %v824, %v823
      %v891 = vpack.c.b16 %v826, %v825
      %v892 = vpack.c.b16 %v828, %v827
      %v893 = vpack.c.b16 %v830, %v829
      %v894 = vpack.c.b16 %v832, %v831
      %v895 = vpack.c.b16 %v834, %v833
      %v896 = vpack.c.b16 %v836, %v835
      %v897 = vpack.c.b16 %v838, %v837
      %v898 = vpack.c.b16 %v840, %v839
      %v899 = vpack.c.b16 %v842, %v841
      %v900 = vpack.c.b16 %v844, %v843
      %v901 = vpack.c.b16 %v846, %v845
      %v902 = vpack.c.b16 %v848, %v847
      %v903 = vpack.c.b16 %v850, %v849
      %v904 = vpack.c.b16 %v852, %v851
      %v905 = vpack.c.b16 %v854, %v853
      %v906 = vpack.c.b16 %v856, %v855
      %v907 = vpack.c.b16 %v858, %v857
      %v908 = vpack.c.b16 %v860, %v859
      %957 = vmatprep.subr.bf16.mxu0 0
      %958 = vmatpush1.bf16.msra.mxu0 %v861
      %959 = vmatprep.subr.bf16.mxu0 0
      %960 = vmatpush1.bf16.msra.mxu0 %v862
      %961 = vmatprep.subr.bf16.mxu0 0
      %962 = vmatpush1.bf16.msra.mxu0 %v863
      %963 = vmatprep.subr.bf16.mxu0 0
      %964 = vmatpush1.bf16.msra.mxu0 %v864
      %965 = vmatprep.subr.bf16.mxu0 0
      %966 = vmatpush1.bf16.msra.mxu0 %v865
      %967 = vmatprep.subr.bf16.mxu0 0
      %968 = vmatpush1.bf16.msra.mxu0 %v866
      %969 = vmatprep.subr.bf16.mxu0 0
      %970 = vmatpush1.bf16.msra.mxu0 %v867
      %971 = vmatprep.subr.bf16.mxu0 0
      %972 = vmatpush1.bf16.msra.mxu0 %v868
      %973 = vmatprep.subr.bf16.mxu0 0
      %974 = vmatpush1.bf16.msra.mxu0 %v869
      %975 = vmatprep.subr.bf16.mxu0 0
      %976 = vmatpush1.bf16.msra.mxu0 %v870
      %977 = vmatprep.subr.bf16.mxu0 0
      %978 = vmatpush1.bf16.msra.mxu0 %v871
      %979 = vmatprep.subr.bf16.mxu0 0
      %980 = vmatpush1.bf16.msra.mxu0 %v872
      %981 = vmatprep.subr.bf16.mxu0 0
      %982 = vmatpush1.bf16.msra.mxu0 %v873
      %983 = vmatprep.subr.bf16.mxu0 0
      %984 = vmatpush1.bf16.msra.mxu0 %v874
      %985 = vmatprep.subr.bf16.mxu0 0
      %986 = vmatpush1.bf16.msra.mxu0 %v875
      %987 = vmatprep.subr.bf16.mxu0 0
      %988 = vmatpush1.bf16.msra.mxu0 %v876
      %989 = vmatprep.mubr.bf16.mxu0 %v574
      %990 = vmatmul.mubr.bf16.gmra.mrb[0].mxu0 %v573
      %v991 = vpop.f32.mrb[0].mxu0
      %v992 = vadd.f32 %v427, %v991
      %v993 = vpop.f32.mrb[0].mxu0
      %v994 = vpop.f32.mrb[0].mxu0
      %v995 = vadd.f32 %v427, %v994
      %v996 = vpop.f32.mrb[0].mxu0
      %997 = vmatprep.mubr.bf16.mxu0 %v580
      %998 = vmatmul.mubr.bf16.gmra.mrb[0].mxu0 %v579
      %v999 = vpop.f32.mrb[0].mxu0
      %v1000 = vadd.f32 %v427, %v999
      %v1001 = vpop.f32.mrb[0].mxu0
      %v1002 = vpop.f32.mrb[0].mxu0
      %v1003 = vadd.f32 %v427, %v1002
      %v1004 = vpop.f32.mrb[0].mxu0
      %1005 = vmatprep.mubr.bf16.mxu0 %v586
      %1006 = vmatmul.mubr.bf16.gmra.mrb[0].mxu0 %v585
      %v1007 = vpop.f32.mrb[0].mxu0
      %v1008 = vadd.f32 %v427, %v1007
      %v1009 = vpop.f32.mrb[0].mxu0
      %v1010 = vpop.f32.mrb[0].mxu0
      %v1011 = vadd.f32 %v427, %v1010
      %v1012 = vpop.f32.mrb[0].mxu0
      %1013 = vmatprep.mubr.bf16.mxu0 %v592
      %1014 = vmatmul.mubr.bf16.gmra.mrb[0].mxu0 %v591
      %v1015 = vpop.f32.mrb[0].mxu0
      %v1016 = vadd.f32 %v427, %v1015
      %v1017 = vpop.f32.mrb[0].mxu0
      %v1018 = vpop.f32.mrb[0].mxu0
      %v1019 = vadd.f32 %v427, %v1018
      %v1020 = vpop.f32.mrb[0].mxu0
      %1021 = vmatprep.mubr.bf16.mxu0 %v598
      %1022 = vmatmul.mubr.bf16.gmra.mrb[0].mxu0 %v597
      %v1023 = vpop.f32.mrb[0].mxu0
      %v1024 = vadd.f32 %v427, %v1023
      %v1025 = vpop.f32.mrb[0].mxu0
      %v1026 = vpop.f32.mrb[0].mxu0
      %v1027 = vadd.f32 %v427, %v1026
      %v1028 = vpop.f32.mrb[0].mxu0
      %1029 = vmatprep.mubr.bf16.mxu0 %v604
      %1030 = vmatmul.mubr.bf16.gmra.mrb[0].mxu0 %v603
      %v1031 = vpop.f32.mrb[0].mxu0
      %v1032 = vadd.f32 %v427, %v1031
      %v1033 = vpop.f32.mrb[0].mxu0
      %v1034 = vpop.f32.mrb[0].mxu0
      %v1035 = vadd.f32 %v427, %v1034
      %v1036 = vpop.f32.mrb[0].mxu0
      %1037 = vmatprep.mubr.bf16.mxu0 %v610
      %1038 = vmatmul.mubr.bf16.gmra.mrb[0].mxu0 %v609
      %v1039 = vpop.f32.mrb[0].mxu0
      %v1040 = vadd.f32 %v427, %v1039
      %v1041 = vpop.f32.mrb[0].mxu0
      %v1042 = vpop.f32.mrb[0].mxu0
      %v1043 = vadd.f32 %v427, %v1042
      %v1044 = vpop.f32.mrb[0].mxu0
      %1045 = vmatprep.mubr.bf16.mxu0 %v616
      %1046 = vmatmul.mubr.bf16.gmra.mrb[0].mxu0 %v615
      %v1047 = vpop.f32.mrb[0].mxu0
      %v1048 = vadd.f32 %v427, %v1047
      %v1049 = vpop.f32.mrb[0].mxu0
      %v1050 = vpop.f32.mrb[0].mxu0
      %v1051 = vadd.f32 %v427, %v1050
      %v1052 = vpop.f32.mrb[0].mxu0
      %1053 = vdwg.mxu0
      %1054 = vmatprep.subr.bf16.mxu0 0
      %1055 = vmatpush1.bf16.msra.mxu0 %v877
      %1056 = vmatprep.subr.bf16.mxu0 0
      %1057 = vmatpush1.bf16.msra.mxu0 %v878
      %1058 = vmatprep.subr.bf16.mxu0 0
      %1059 = vmatpush1.bf16.msra.mxu0 %v879
      %1060 = vmatprep.subr.bf16.mxu0 0
      %1061 = vmatpush1.bf16.msra.mxu0 %v880
      %1062 = vmatprep.subr.bf16.mxu0 0
      %1063 = vmatpush1.bf16.msra.mxu0 %v881
      %1064 = vmatprep.subr.bf16.mxu0 0
      %1065 = vmatpush1.bf16.msra.mxu0 %v882
      %1066 = vmatprep.subr.bf16.mxu0 0
      %1067 = vmatpush1.bf16.msra.mxu0 %v883
      %1068 = vmatprep.subr.bf16.mxu0 0
      %1069 = vmatpush1.bf16.msra.mxu0 %v884
      %1070 = vmatprep.subr.bf16.mxu0 0
      %1071 = vmatpush1.bf16.msra.mxu0 %v885
      %1072 = vmatprep.subr.bf16.mxu0 0
      %1073 = vmatpush1.bf16.msra.mxu0 %v886
      %1074 = vmatprep.subr.bf16.mxu0 0
      %1075 = vmatpush1.bf16.msra.mxu0 %v887
      %1076 = vmatprep.subr.bf16.mxu0 0
      %1077 = vmatpush1.bf16.msra.mxu0 %v888
      %1078 = vmatprep.subr.bf16.mxu0 0
      %1079 = vmatpush1.bf16.msra.mxu0 %v889
      %1080 = vmatprep.subr.bf16.mxu0 0
      %1081 = vmatpush1.bf16.msra.mxu0 %v890
      %1082 = vmatprep.subr.bf16.mxu0 0
      %1083 = vmatpush1.bf16.msra.mxu0 %v891
      %1084 = vmatprep.subr.bf16.mxu0 0
      %1085 = vmatpush1.bf16.msra.mxu0 %v892
      %1086 = vmatprep.mubr.bf16.mxu0 %v576
      %1087 = vmatmul.mubr.bf16.gmra.mrb[0].mxu0 %v575
      %v1088 = vpop.f32.mrb[0].mxu0
      %v1089 = vadd.f32 %v992, %v1088
      %v1090 = vpop.f32.mrb[0].mxu0
      %v1091 = vpop.f32.mrb[0].mxu0
      %v1092 = vadd.f32 %v995, %v1091
      %v1093 = vpop.f32.mrb[0].mxu0
      %1094 = vmatprep.mubr.bf16.mxu0 %v582
      %1095 = vmatmul.mubr.bf16.gmra.mrb[0].mxu0 %v581
      %v1096 = vpop.f32.mrb[0].mxu0
      %v1097 = vadd.f32 %v1000, %v1096
      %v1098 = vpop.f32.mrb[0].mxu0
      %v1099 = vpop.f32.mrb[0].mxu0
      %v1100 = vadd.f32 %v1003, %v1099
      %v1101 = vpop.f32.mrb[0].mxu0
      %1102 = vmatprep.mubr.bf16.mxu0 %v588
      %1103 = vmatmul.mubr.bf16.gmra.mrb[0].mxu0 %v587
      %v1104 = vpop.f32.mrb[0].mxu0
      %v1105 = vadd.f32 %v1008, %v1104
      %v1106 = vpop.f32.mrb[0].mxu0
      %v1107 = vpop.f32.mrb[0].mxu0
      %v1108 = vadd.f32 %v1011, %v1107
      %v1109 = vpop.f32.mrb[0].mxu0
      %1110 = vmatprep.mubr.bf16.mxu0 %v594
      %1111 = vmatmul.mubr.bf16.gmra.mrb[0].mxu0 %v593
      %v1112 = vpop.f32.mrb[0].mxu0
      %v1113 = vadd.f32 %v1016, %v1112
      %v1114 = vpop.f32.mrb[0].mxu0
      %v1115 = vpop.f32.mrb[0].mxu0
      %v1116 = vadd.f32 %v1019, %v1115
      %v1117 = vpop.f32.mrb[0].mxu0
      %1118 = vmatprep.mubr.bf16.mxu0 %v600
      %1119 = vmatmul.mubr.bf16.gmra.mrb[0].mxu0 %v599
      %v1120 = vpop.f32.mrb[0].mxu0
      %v1121 = vadd.f32 %v1024, %v1120
      %v1122 = vpop.f32.mrb[0].mxu0
      %v1123 = vpop.f32.mrb[0].mxu0
      %v1124 = vadd.f32 %v1027, %v1123
      %v1125 = vpop.f32.mrb[0].mxu0
      %1126 = vmatprep.mubr.bf16.mxu0 %v606
      %1127 = vmatmul.mubr.bf16.gmra.mrb[0].mxu0 %v605
      %v1128 = vpop.f32.mrb[0].mxu0
      %v1129 = vadd.f32 %v1032, %v1128
      %v1130 = vpop.f32.mrb[0].mxu0
      %v1131 = vpop.f32.mrb[0].mxu0
      %v1132 = vadd.f32 %v1035, %v1131
      %v1133 = vpop.f32.mrb[0].mxu0
      %1134 = vmatprep.mubr.bf16.mxu0 %v612
      %1135 = vmatmul.mubr.bf16.gmra.mrb[0].mxu0 %v611
      %v1136 = vpop.f32.mrb[0].mxu0
      %v1137 = vadd.f32 %v1040, %v1136
      %v1138 = vpop.f32.mrb[0].mxu0
      %v1139 = vpop.f32.mrb[0].mxu0
      %v1140 = vadd.f32 %v1043, %v1139
      %v1141 = vpop.f32.mrb[0].mxu0
      %1142 = vmatprep.mubr.bf16.mxu0 %v618
      %1143 = vmatmul.mubr.bf16.gmra.mrb[0].mxu0 %v617
      %v1144 = vpop.f32.mrb[0].mxu0
      %v1145 = vadd.f32 %v1048, %v1144
      %v1146 = vpop.f32.mrb[0].mxu0
      %v1147 = vpop.f32.mrb[0].mxu0
      %v1148 = vadd.f32 %v1051, %v1147
      %v1149 = vpop.f32.mrb[0].mxu0
      %1150 = vdwg.mxu0
      %1151 = vmatprep.subr.bf16.mxu0 0
      %1152 = vmatpush1.bf16.msra.mxu0 %v893
      %1153 = vmatprep.subr.bf16.mxu0 0
      %1154 = vmatpush1.bf16.msra.mxu0 %v894
      %1155 = vmatprep.subr.bf16.mxu0 0
      %1156 = vmatpush1.bf16.msra.mxu0 %v895
      %1157 = vmatprep.subr.bf16.mxu0 0
      %1158 = vmatpush1.bf16.msra.mxu0 %v896
      %1159 = vmatprep.subr.bf16.mxu0 0
      %1160 = vmatpush1.bf16.msra.mxu0 %v897
      %1161 = vmatprep.subr.bf16.mxu0 0
      %1162 = vmatpush1.bf16.msra.mxu0 %v898
      %1163 = vmatprep.subr.bf16.mxu0 0
      %1164 = vmatpush1.bf16.msra.mxu0 %v899
      %1165 = vmatprep.subr.bf16.mxu0 0
      %1166 = vmatpush1.bf16.msra.mxu0 %v900
      %1167 = vmatprep.subr.bf16.mxu0 0
      %1168 = vmatpush1.bf16.msra.mxu0 %v901
      %1169 = vmatprep.subr.bf16.mxu0 0
      %1170 = vmatpush1.bf16.msra.mxu0 %v902
      %1171 = vmatprep.subr.bf16.mxu0 0
      %1172 = vmatpush1.bf16.msra.mxu0 %v903
      %1173 = vmatprep.subr.bf16.mxu0 0
      %1174 = vmatpush1.bf16.msra.mxu0 %v904
      %1175 = vmatprep.subr.bf16.mxu0 0
      %1176 = vmatpush1.bf16.msra.mxu0 %v905
      %1177 = vmatprep.subr.bf16.mxu0 0
      %1178 = vmatpush1.bf16.msra.mxu0 %v906
      %1179 = vmatprep.subr.bf16.mxu0 0
      %1180 = vmatpush1.bf16.msra.mxu0 %v907
      %1181 = vmatprep.subr.bf16.mxu0 0
      %1182 = vmatpush1.bf16.msra.mxu0 %v908
      %1183 = vmatprep.mubr.bf16.mxu0 %v578
      %1184 = vmatmul.mubr.bf16.gmra.mrb[0].mxu0 %v577
      %v1185 = vpop.f32.mrb[0].mxu0
      %v1186 = vadd.f32 %v1089, %v1185
      %v1187 = vpop.f32.mrb[0].mxu0
      %v1188 = vpop.f32.mrb[0].mxu0
      %v1189 = vadd.f32 %v1092, %v1188
      %v1190 = vpop.f32.mrb[0].mxu0
      %1191 = vmatprep.mubr.bf16.mxu0 %v584
      %1192 = vmatmul.mubr.bf16.gmra.mrb[0].mxu0 %v583
      %v1193 = vpop.f32.mrb[0].mxu0
      %v1194 = vadd.f32 %v1097, %v1193
      %v1195 = vpop.f32.mrb[0].mxu0
      %v1196 = vpop.f32.mrb[0].mxu0
      %v1197 = vadd.f32 %v1100, %v1196
      %v1198 = vpop.f32.mrb[0].mxu0
      %1199 = vmatprep.mubr.bf16.mxu0 %v590
      %1200 = vmatmul.mubr.bf16.gmra.mrb[0].mxu0 %v589
      %v1201 = vpop.f32.mrb[0].mxu0
      %v1202 = vadd.f32 %v1105, %v1201
      %v1203 = vpop.f32.mrb[0].mxu0
      %v1204 = vpop.f32.mrb[0].mxu0
      %v1205 = vadd.f32 %v1108, %v1204
      %v1206 = vpop.f32.mrb[0].mxu0
      %1207 = vmatprep.mubr.bf16.mxu0 %v596
      %1208 = vmatmul.mubr.bf16.gmra.mrb[0].mxu0 %v595
      %v1209 = vpop.f32.mrb[0].mxu0
      %v1210 = vadd.f32 %v1113, %v1209
      %v1211 = vpop.f32.mrb[0].mxu0
      %v1212 = vpop.f32.mrb[0].mxu0
      %v1213 = vadd.f32 %v1116, %v1212
      %v1214 = vpop.f32.mrb[0].mxu0
      %1215 = vmatprep.mubr.bf16.mxu0 %v602
      %1216 = vmatmul.mubr.bf16.gmra.mrb[0].mxu0 %v601
      %v1217 = vpop.f32.mrb[0].mxu0
      %v1218 = vadd.f32 %v1121, %v1217
      %v1219 = vpop.f32.mrb[0].mxu0
      %v1220 = vpop.f32.mrb[0].mxu0
      %v1221 = vadd.f32 %v1124, %v1220
      %v1222 = vpop.f32.mrb[0].mxu0
      %1223 = vmatprep.mubr.bf16.mxu0 %v608
      %1224 = vmatmul.mubr.bf16.gmra.mrb[0].mxu0 %v607
      %v1225 = vpop.f32.mrb[0].mxu0
      %v1226 = vadd.f32 %v1129, %v1225
      %v1227 = vpop.f32.mrb[0].mxu0
      %v1228 = vpop.f32.mrb[0].mxu0
      %v1229 = vadd.f32 %v1132, %v1228
      %v1230 = vpop.f32.mrb[0].mxu0
      %1231 = vmatprep.mubr.bf16.mxu0 %v614
      %1232 = vmatmul.mubr.bf16.gmra.mrb[0].mxu0 %v613
      %v1233 = vpop.f32.mrb[0].mxu0
      %v1234 = vadd.f32 %v1137, %v1233
      %v1235 = vpop.f32.mrb[0].mxu0
      %v1236 = vpop.f32.mrb[0].mxu0
      %v1237 = vadd.f32 %v1140, %v1236
      %v1238 = vpop.f32.mrb[0].mxu0
      %1239 = vmatprep.mubr.bf16.mxu0 %v620
      %1240 = vmatmul.mubr.bf16.gmra.mrb[0].mxu0 %v619
      %v1241 = vpop.f32.mrb[0].mxu0
      %v1242 = vadd.f32 %v1145, %v1241
      %v1243 = vpop.f32.mrb[0].mxu0
      %v1244 = vpop.f32.mrb[0].mxu0
      %v1245 = vadd.f32 %v1148, %v1244
      %v1246 = vpop.f32.mrb[0].mxu0
      %1247 = vdwg.mxu0
      %vm1248 = vcmp.ge.f32.partialorder %v1186, 0.0
      %vm1249 = vcmp.ge.f32.partialorder %v1189, 0.0
      %vm1250 = vcmp.ge.f32.partialorder %v1194, 0.0
      %vm1251 = vcmp.ge.f32.partialorder %v1197, 0.0
      %vm1252 = vcmp.ge.f32.partialorder %v1202, 0.0
      %vm1253 = vcmp.ge.f32.partialorder %v1205, 0.0
      %vm1254 = vcmp.ge.f32.partialorder %v1210, 0.0
      %vm1255 = vcmp.ge.f32.partialorder %v1213, 0.0
      %vm1256 = vcmp.ge.f32.partialorder %v1218, 0.0
      %vm1257 = vcmp.ge.f32.partialorder %v1221, 0.0
      %vm1258 = vcmp.ge.f32.partialorder %v1226, 0.0
      %vm1259 = vcmp.ge.f32.partialorder %v1229, 0.0
      %vm1260 = vcmp.ge.f32.partialorder %v1234, 0.0
      %vm1261 = vcmp.ge.f32.partialorder %v1237, 0.0
      %vm1262 = vcmp.ge.f32.partialorder %v1242, 0.0
      %vm1263 = vcmp.ge.f32.partialorder %v1245, 0.0
      %v1264 = vmul.f32 %v1186, 0.2
      %v1265 = vmul.f32 %v1189, 0.2
      %v1266 = vmul.f32 %v1194, 0.2
      %v1267 = vmul.f32 %v1197, 0.2
      %v1268 = vmul.f32 %v1202, 0.2
      %v1269 = vmul.f32 %v1205, 0.2
      %v1270 = vmul.f32 %v1210, 0.2
      %v1271 = vmul.f32 %v1213, 0.2
      %v1272 = vmul.f32 %v1218, 0.2
      %v1273 = vmul.f32 %v1221, 0.2
      %v1274 = vmul.f32 %v1226, 0.2
      %v1275 = vmul.f32 %v1229, 0.2
      %v1276 = vmul.f32 %v1234, 0.2
      %v1277 = vmul.f32 %v1237, 0.2
      %v1278 = vmul.f32 %v1242, 0.2
      %v1279 = vmul.f32 %v1245, 0.2
      %v1280 = vsel %vm1248, %v1186, %v1264
      %v1281 = vsel %vm1249, %v1189, %v1265
      %v1282 = vsel %vm1250, %v1194, %v1266
      %v1283 = vsel %vm1251, %v1197, %v1267
      %v1284 = vsel %vm1252, %v1202, %v1268
      %v1285 = vsel %vm1253, %v1205, %v1269
      %v1286 = vsel %vm1254, %v1210, %v1270
      %v1287 = vsel %vm1255, %v1213, %v1271
      %v1288 = vsel %vm1256, %v1218, %v1272
      %v1289 = vsel %vm1257, %v1221, %v1273
      %v1290 = vsel %vm1258, %v1226, %v1274
      %v1291 = vsel %vm1259, %v1229, %v1275
      %v1292 = vsel %vm1260, %v1234, %v1276
      %v1293 = vsel %vm1261, %v1237, %v1277
      %v1294 = vsel %vm1262, %v1242, %v1278
      %v1295 = vsel %vm1263, %v1245, %v1279
      %v1296 = vpack.c.bf16 %v1281, %v1280
      %v1297 = vpack.c.bf16 %v1283, %v1282
      %v1298 = vpack.c.bf16 %v1285, %v1284
      %v1299 = vpack.c.bf16 %v1287, %v1286
      %v1300 = vpack.c.bf16 %v1289, %v1288
      %v1301 = vpack.c.bf16 %v1291, %v1290
      %v1302 = vpack.c.bf16 %v1293, %v1292
      %v1303 = vpack.c.bf16 %v1295, %v1294
      %v1304 = vld [vmem:[%s3] sm:$0xf]
      %v1305 = vld [vmem:[%s3 + $0x4] sm:$0xf]
      %v1306 = vld [vmem:[%s3 + $0x8] sm:$0xf]
      %v1307 = vld [vmem:[%s3 + $0xc] sm:$0xf]
      %v1308 = vld [vmem:[%s3 + $0x10] sm:$0xf]
      %v1309 = vld [vmem:[%s3 + $0x14] sm:$0xf]
      %v1310 = vld [vmem:[%s3 + $0x18] sm:$0xf]
      %v1311 = vld [vmem:[%s3 + $0x1c] sm:$0xf]
      %v1312 = vld [vmem:[%s3 + $0x20] sm:$0xf]
      %v1313 = vld [vmem:[%s3 + $0x24] sm:$0xf]
      %v1314 = vld [vmem:[%s3 + $0x28] sm:$0xf]
      %v1315 = vld [vmem:[%s3 + $0x2c] sm:$0xf]
      %v1316 = vld [vmem:[%s3 + $0x30] sm:$0xf]
      %v1317 = vld [vmem:[%s3 + $0x34] sm:$0xf]
      %v1318 = vld [vmem:[%s3 + $0x38] sm:$0xf]
      %v1319 = vld [vmem:[%s3 + $0x3c] sm:$0xf]
      %v1320 = vld [vmem:[%s4] sm:$0x1]
      %v1322 = vlaneseq
      %v1323 = vshrl.u32 %v1322, 7
      %v1324 = vsub.s32 0, %v1323
      %v1325 = vrot.slane %v1320, %v1324
      %v1343 = vunpack.c.l.b16 %v1304
      %v1344 = vunpack.c.l.b16 %v1305
      %v1345 = vunpack.c.l.b16 %v1306
      %v1346 = vunpack.c.l.b16 %v1307
      %v1347 = vunpack.c.l.b16 %v1308
      %v1348 = vunpack.c.l.b16 %v1309
      %v1349 = vunpack.c.l.b16 %v1310
      %v1350 = vunpack.c.l.b16 %v1311
      %v1351 = vunpack.c.l.b16 %v1312
      %v1352 = vunpack.c.l.b16 %v1313
      %v1353 = vunpack.c.l.b16 %v1314
      %v1354 = vunpack.c.l.b16 %v1315
      %v1355 = vunpack.c.l.b16 %v1316
      %v1356 = vunpack.c.l.b16 %v1317
      %v1357 = vunpack.c.l.b16 %v1318
      %v1358 = vunpack.c.l.b16 %v1319
      %v1359 = vpack.c.b16 %v1344, %v1343
      %v1360 = vpack.c.b16 %v1346, %v1345
      %v1361 = vpack.c.b16 %v1348, %v1347
      %v1362 = vpack.c.b16 %v1350, %v1349
      %v1363 = vpack.c.b16 %v1352, %v1351
      %v1364 = vpack.c.b16 %v1354, %v1353
      %v1365 = vpack.c.b16 %v1356, %v1355
      %v1366 = vpack.c.b16 %v1358, %v1357
      %1375 = vmatprep.subr.bf16.mxu0 0
      %1376 = vmatpush1.bf16.msra.mxu0 %v1359
      %1377 = vmatprep.subr.bf16.mxu0 0
      %1378 = vmatpush1.bf16.msra.mxu0 %v1360
      %1379 = vmatprep.subr.bf16.mxu0 0
      %1380 = vmatpush1.bf16.msra.mxu0 %v1361
      %1381 = vmatprep.subr.bf16.mxu0 0
      %1382 = vmatpush1.bf16.msra.mxu0 %v1362
      %1383 = vmatprep.subr.bf16.mxu0 0
      %1384 = vmatpush1.bf16.msra.mxu0 %v1363
      %1385 = vmatprep.subr.bf16.mxu0 0
      %1386 = vmatpush1.bf16.msra.mxu0 %v1364
      %1387 = vmatprep.subr.bf16.mxu0 0
      %1388 = vmatpush1.bf16.msra.mxu0 %v1365
      %1389 = vmatprep.subr.bf16.mxu0 0
      %1390 = vmatpush1.bf16.msra.mxu0 %v1366
      %1391 = vmatprep.subr.bf16.mxu0 0
      %1392 = vmatpush1.bf16.msra.mxu0 0
      %1393 = vmatprep.subr.bf16.mxu0 0
      %1394 = vmatpush1.bf16.msra.mxu0 0
      %1395 = vmatprep.subr.bf16.mxu0 0
      %1396 = vmatpush1.bf16.msra.mxu0 0
      %1397 = vmatprep.subr.bf16.mxu0 0
      %1398 = vmatpush1.bf16.msra.mxu0 0
      %1399 = vmatprep.subr.bf16.mxu0 0
      %1400 = vmatpush1.bf16.msra.mxu0 0
      %1401 = vmatprep.subr.bf16.mxu0 0
      %1402 = vmatpush1.bf16.msra.mxu0 0
      %1403 = vmatprep.subr.bf16.mxu0 0
      %1404 = vmatpush1.bf16.msra.mxu0 0
      %1405 = vmatprep.subr.bf16.mxu0 0
      %1406 = vmatpush1.bf16.msra.mxu0 0
      %1407 = vmatprep.mubr.bf16.mxu0 0
      %1408 = vmatmul.mubr.bf16.gmra.mrb[0].mxu0 %v1296
      %v1409 = vpop.f32.mrb[0].mxu0
      %v1410 = vadd.f32 %v1325, %v1409
      %v1411 = vpop.f32.mrb[0].mxu0
      %v1412 = vpop.f32.mrb[0].mxu0
      %v1413 = vadd.f32 %v1325, %v1412
      %v1414 = vpop.f32.mrb[0].mxu0
      %1415 = vmatprep.mubr.bf16.mxu0 0
      %1416 = vmatmul.mubr.bf16.gmra.mrb[0].mxu0 %v1297
      %v1417 = vpop.f32.mrb[0].mxu0
      %v1418 = vadd.f32 %v1325, %v1417
      %v1419 = vpop.f32.mrb[0].mxu0
      %v1420 = vpop.f32.mrb[0].mxu0
      %v1421 = vadd.f32 %v1325, %v1420
      %v1422 = vpop.f32.mrb[0].mxu0
      %1423 = vmatprep.mubr.bf16.mxu0 0
      %1424 = vmatmul.mubr.bf16.gmra.mrb[0].mxu0 %v1298
      %v1425 = vpop.f32.mrb[0].mxu0
      %v1426 = vadd.f32 %v1325, %v1425
      %v1427 = vpop.f32.mrb[0].mxu0
      %v1428 = vpop.f32.mrb[0].mxu0
      %v1429 = vadd.f32 %v1325, %v1428
      %v1430 = vpop.f32.mrb[0].mxu0
      %1431 = vmatprep.mubr.bf16.mxu0 0
      %1432 = vmatmul.mubr.bf16.gmra.mrb[0].mxu0 %v1299
      %v1433 = vpop.f32.mrb[0].mxu0
      %v1434 = vadd.f32 %v1325, %v1433
      %v1435 = vpop.f32.mrb[0].mxu0
      %v1436 = vpop.f32.mrb[0].mxu0
      %v1437 = vadd.f32 %v1325, %v1436
      %v1438 = vpop.f32.mrb[0].mxu0
      %1439 = vmatprep.mubr.bf16.mxu0 0
      %1440 = vmatmul.mubr.bf16.gmra.mrb[0].mxu0 %v1300
      %v1441 = vpop.f32.mrb[0].mxu0
      %v1442 = vadd.f32 %v1325, %v1441
      %v1443 = vpop.f32.mrb[0].mxu0
      %v1444 = vpop.f32.mrb[0].mxu0
      %v1445 = vadd.f32 %v1325, %v1444
      %v1446 = vpop.f32.mrb[0].mxu0
      %1447 = vmatprep.mubr.bf16.mxu0 0
      %1448 = vmatmul.mubr.bf16.gmra.mrb[0].mxu0 %v1301
      %v1449 = vpop.f32.mrb[0].mxu0
      %v1450 = vadd.f32 %v1325, %v1449
      %v1451 = vpop.f32.mrb[0].mxu0
      %v1452 = vpop.f32.mrb[0].mxu0
      %v1453 = vadd.f32 %v1325, %v1452
      %v1454 = vpop.f32.mrb[0].mxu0
      %1455 = vmatprep.mubr.bf16.mxu0 0
      %1456 = vmatmul.mubr.bf16.gmra.mrb[0].mxu0 %v1302
      %v1457 = vpop.f32.mrb[0].mxu0
      %v1458 = vadd.f32 %v1325, %v1457
      %v1459 = vpop.f32.mrb[0].mxu0
      %v1460 = vpop.f32.mrb[0].mxu0
      %v1461 = vadd.f32 %v1325, %v1460
      %v1462 = vpop.f32.mrb[0].mxu0
      %1463 = vmatprep.mubr.bf16.mxu0 0
      %1464 = vmatmul.mubr.bf16.gmra.mrb[0].mxu0 %v1303
      %v1465 = vpop.f32.mrb[0].mxu0
      %v1466 = vadd.f32 %v1325, %v1465
      %v1467 = vpop.f32.mrb[0].mxu0
      %v1468 = vpop.f32.mrb[0].mxu0
      %v1469 = vadd.f32 %v1325, %v1468
      %v1470 = vpop.f32.mrb[0].mxu0
      %1471 = vdwg.mxu0
      %vm1472 = vcmp.ge.f32.partialorder %v1410, 0.0
      %vm1473 = vcmp.ge.f32.partialorder %v1413, 0.0
      %vm1474 = vcmp.ge.f32.partialorder %v1418, 0.0
      %vm1475 = vcmp.ge.f32.partialorder %v1421, 0.0
      %vm1476 = vcmp.ge.f32.partialorder %v1426, 0.0
      %vm1477 = vcmp.ge.f32.partialorder %v1429, 0.0
      %vm1478 = vcmp.ge.f32.partialorder %v1434, 0.0
      %vm1479 = vcmp.ge.f32.partialorder %v1437, 0.0
      %vm1480 = vcmp.ge.f32.partialorder %v1442, 0.0
      %vm1481 = vcmp.ge.f32.partialorder %v1445, 0.0
      %vm1482 = vcmp.ge.f32.partialorder %v1450, 0.0
      %vm1483 = vcmp.ge.f32.partialorder %v1453, 0.0
      %vm1484 = vcmp.ge.f32.partialorder %v1458, 0.0
      %vm1485 = vcmp.ge.f32.partialorder %v1461, 0.0
      %vm1486 = vcmp.ge.f32.partialorder %v1466, 0.0
      %vm1487 = vcmp.ge.f32.partialorder %v1469, 0.0
      %v1488 = vmul.f32 %v1410, 0.2
      %v1489 = vmul.f32 %v1413, 0.2
      %v1490 = vmul.f32 %v1418, 0.2
      %v1491 = vmul.f32 %v1421, 0.2
      %v1492 = vmul.f32 %v1426, 0.2
      %v1493 = vmul.f32 %v1429, 0.2
      %v1494 = vmul.f32 %v1434, 0.2
      %v1495 = vmul.f32 %v1437, 0.2
      %v1496 = vmul.f32 %v1442, 0.2
      %v1497 = vmul.f32 %v1445, 0.2
      %v1498 = vmul.f32 %v1450, 0.2
      %v1499 = vmul.f32 %v1453, 0.2
      %v1500 = vmul.f32 %v1458, 0.2
      %v1501 = vmul.f32 %v1461, 0.2
      %v1502 = vmul.f32 %v1466, 0.2
      %v1503 = vmul.f32 %v1469, 0.2
      %v1504 = vsel %vm1472, %v1410, %v1488
      %v1505 = vsel %vm1473, %v1413, %v1489
      %v1506 = vsel %vm1474, %v1418, %v1490
      %v1507 = vsel %vm1475, %v1421, %v1491
      %v1508 = vsel %vm1476, %v1426, %v1492
      %v1509 = vsel %vm1477, %v1429, %v1493
      %v1510 = vsel %vm1478, %v1434, %v1494
      %v1511 = vsel %vm1479, %v1437, %v1495
      %v1512 = vsel %vm1480, %v1442, %v1496
      %v1513 = vsel %vm1481, %v1445, %v1497
      %v1514 = vsel %vm1482, %v1450, %v1498
      %v1515 = vsel %vm1483, %v1453, %v1499
      %v1516 = vsel %vm1484, %v1458, %v1500
      %v1517 = vsel %vm1485, %v1461, %v1501
      %v1518 = vsel %vm1486, %v1466, %v1502
      %v1519 = vsel %vm1487, %v1469, %v1503
      %v1520 = vpack.c.bf16 %v1505, %v1504
      %v1521 = vpack.c.bf16 %v1507, %v1506
      %v1522 = vpack.c.bf16 %v1509, %v1508
      %v1523 = vpack.c.bf16 %v1511, %v1510
      %v1524 = vpack.c.bf16 %v1513, %v1512
      %v1525 = vpack.c.bf16 %v1515, %v1514
      %v1526 = vpack.c.bf16 %v1517, %v1516
      %v1527 = vpack.c.bf16 %v1519, %v1518
      %v1528 = vld [vmem:[%s5] sm:$0xf]
      %v1529 = vld [vmem:[%s5 + $0x4] sm:$0xf]
      %s1530 = scalar_lea.vmem %s5, 8
      %v1531 = vld [vmem:[%s1530] sm:$0xf]
      %v1532 = vld [vmem:[%s1530 + $0x4] sm:$0xf]
      %v1534 = vrot.slane %v1520, 4
      %v1537 = vunpack.c.l.b16 %v1531
      %v1538 = vunpack.c.l.b16 %v1532
      %v1539 = vpack.c.b16 %v1538, %v1537
      %vm1541 = vcmask 130048
      %v1543 = vsel %vm1541, %v1534, 0
      %1545 = vmatprep.subr.bf16.mxu0 0
      %1546 = vmatpush1.bf16.msra.mxu0 %v1539
      %1547 = vmatprep.subr.bf16.mxu0 0
      %1548 = vmatpush1.bf16.msra.mxu0 0
      %1549 = vmatprep.subr.bf16.mxu0 0
      %1550 = vmatpush1.bf16.msra.mxu0 0
      %1551 = vmatprep.subr.bf16.mxu0 0
      %1552 = vmatpush1.bf16.msra.mxu0 0
      %1553 = vmatprep.subr.bf16.mxu0 0
      %1554 = vmatpush1.bf16.msra.mxu0 0
      %1555 = vmatprep.subr.bf16.mxu0 0
      %1556 = vmatpush1.bf16.msra.mxu0 0
      %1557 = vmatprep.subr.bf16.mxu0 0
      %1558 = vmatpush1.bf16.msra.mxu0 0
      %1559 = vmatprep.subr.bf16.mxu0 0
      %1560 = vmatpush1.bf16.msra.mxu0 0
      %1561 = vmatprep.subr.bf16.mxu0 0
      %1562 = vmatpush1.bf16.msra.mxu0 0
      %1563 = vmatprep.subr.bf16.mxu0 0
      %1564 = vmatpush1.bf16.msra.mxu0 0
      %1565 = vmatprep.subr.bf16.mxu0 0
      %1566 = vmatpush1.bf16.msra.mxu0 0
      %1567 = vmatprep.subr.bf16.mxu0 0
      %1568 = vmatpush1.bf16.msra.mxu0 0
      %1569 = vmatprep.subr.bf16.mxu0 0
      %1570 = vmatpush1.bf16.msra.mxu0 0
      %1571 = vmatprep.subr.bf16.mxu0 0
      %1572 = vmatpush1.bf16.msra.mxu0 0
      %1573 = vmatprep.subr.bf16.mxu0 0
      %1574 = vmatpush1.bf16.msra.mxu0 0
      %1575 = vmatprep.subr.bf16.mxu0 0
      %1576 = vmatpush1.bf16.msra.mxu0 0
      %1577 = vmatprep.mubr.bf16.mxu0 0
      %1578 = vmatmul.mubr.bf16.gmra.mrb[0].mxu0 %v1543
      %v1579 = vpop.f32.mrb[0].mxu0
      %v1580 = vadd.f32 0.0, %v1579
      %v1581 = vpop.f32.mrb[0].mxu0
      %v1582 = vpop.f32.mrb[0].mxu0
      %v1583 = vpop.f32.mrb[0].mxu0
      %1584 = vdwg.mxu0
      %v1587 = vunpack.c.l.b16 %v1528
      %v1588 = vunpack.c.l.b16 %v1529
      %v1589 = vpack.c.b16 %v1588, %v1587
      %v1592 = vsel %vm1541, %v1520, 0
      %1594 = vmatprep.subr.bf16.mxu0 0
      %1595 = vmatpush1.bf16.msra.mxu0 %v1589
      %1596 = vmatprep.subr.bf16.mxu0 0
      %1597 = vmatpush1.bf16.msra.mxu0 0
      %1598 = vmatprep.subr.bf16.mxu0 0
      %1599 = vmatpush1.bf16.msra.mxu0 0
      %1600 = vmatprep.subr.bf16.mxu0 0
      %1601 = vmatpush1.bf16.msra.mxu0 0
      %1602 = vmatprep.subr.bf16.mxu0 0
      %1603 = vmatpush1.bf16.msra.mxu0 0
      %1604 = vmatprep.subr.bf16.mxu0 0
      %1605 = vmatpush1.bf16.msra.mxu0 0
      %1606 = vmatprep.subr.bf16.mxu0 0
      %1607 = vmatpush1.bf16.msra.mxu0 0
      %1608 = vmatprep.subr.bf16.mxu0 0
      %1609 = vmatpush1.bf16.msra.mxu0 0
      %1610 = vmatprep.subr.bf16.mxu0 0
      %1611 = vmatpush1.bf16.msra.mxu0 0
      %1612 = vmatprep.subr.bf16.mxu0 0
      %1613 = vmatpush1.bf16.msra.mxu0 0
      %1614 = vmatprep.subr.bf16.mxu0 0
      %1615 = vmatpush1.bf16.msra.mxu0 0
      %1616 = vmatprep.subr.bf16.mxu0 0
      %1617 = vmatpush1.bf16.msra.mxu0 0
      %1618 = vmatprep.subr.bf16.mxu0 0
      %1619 = vmatpush1.bf16.msra.mxu0 0
      %1620 = vmatprep.subr.bf16.mxu0 0
      %1621 = vmatpush1.bf16.msra.mxu0 0
      %1622 = vmatprep.subr.bf16.mxu0 0
      %1623 = vmatpush1.bf16.msra.mxu0 0
      %1624 = vmatprep.subr.bf16.mxu0 0
      %1625 = vmatpush1.bf16.msra.mxu0 0
      %1626 = vmatprep.mubr.bf16.mxu0 0
      %1627 = vmatmul.mubr.bf16.gmra.mrb[0].mxu0 %v1592
      %v1628 = vpop.f32.mrb[0].mxu0
      %v1629 = vadd.f32 %v1580, %v1628
      %v1630 = vpop.f32.mrb[0].mxu0
      %v1631 = vpop.f32.mrb[0].mxu0
      %v1632 = vpop.f32.mrb[0].mxu0
      %1633 = vdwg.mxu0
      %s1634 = scalar_lea.vmem %s5, 16
      %v1635 = vld [vmem:[%s1634] sm:$0xf]
      %v1636 = vld [vmem:[%s1634 + $0x4] sm:$0xf]
      %v1639 = vunpack.c.l.b16 %v1635
      %v1640 = vunpack.c.l.b16 %v1636
      %v1641 = vpack.c.b16 %v1640, %v1639
      %v1644 = vsel %vm1541, %v1521, 0
      %1646 = vmatprep.subr.bf16.mxu0 0
      %1647 = vmatpush1.bf16.msra.mxu0 %v1641
      %1648 = vmatprep.subr.bf16.mxu0 0
      %1649 = vmatpush1.bf16.msra.mxu0 0
      %1650 = vmatprep.subr.bf16.mxu0 0
      %1651 = vmatpush1.bf16.msra.mxu0 0
      %1652 = vmatprep.subr.bf16.mxu0 0
      %1653 = vmatpush1.bf16.msra.mxu0 0
      %1654 = vmatprep.subr.bf16.mxu0 0
      %1655 = vmatpush1.bf16.msra.mxu0 0
      %1656 = vmatprep.subr.bf16.mxu0 0
      %1657 = vmatpush1.bf16.msra.mxu0 0
      %1658 = vmatprep.subr.bf16.mxu0 0
      %1659 = vmatpush1.bf16.msra.mxu0 0
      %1660 = vmatprep.subr.bf16.mxu0 0
      %1661 = vmatpush1.bf16.msra.mxu0 0
      %1662 = vmatprep.subr.bf16.mxu0 0
      %1663 = vmatpush1.bf16.msra.mxu0 0
      %1664 = vmatprep.subr.bf16.mxu0 0
      %1665 = vmatpush1.bf16.msra.mxu0 0
      %1666 = vmatprep.subr.bf16.mxu0 0
      %1667 = vmatpush1.bf16.msra.mxu0 0
      %1668 = vmatprep.subr.bf16.mxu0 0
      %1669 = vmatpush1.bf16.msra.mxu0 0
      %1670 = vmatprep.subr.bf16.mxu0 0
      %1671 = vmatpush1.bf16.msra.mxu0 0
      %1672 = vmatprep.subr.bf16.mxu0 0
      %1673 = vmatpush1.bf16.msra.mxu0 0
      %1674 = vmatprep.subr.bf16.mxu0 0
      %1675 = vmatpush1.bf16.msra.mxu0 0
      %1676 = vmatprep.subr.bf16.mxu0 0
      %1677 = vmatpush1.bf16.msra.mxu0 0
      %1678 = vmatprep.mubr.bf16.mxu0 0
      %1679 = vmatmul.mubr.bf16.gmra.mrb[0].mxu0 %v1644
      %v1680 = vpop.f32.mrb[0].mxu0
      %v1681 = vadd.f32 0.0, %v1680
      %v1682 = vpop.f32.mrb[0].mxu0
      %v1683 = vpop.f32.mrb[0].mxu0
      %v1684 = vpop.f32.mrb[0].mxu0
      %1685 = vdwg.mxu0
      %v1686 = vadd.f32 %v1629, %v1681
      %s1687 = scalar_lea.vmem %s5, 24
      %v1688 = vld [vmem:[%s1687] sm:$0xf]
      %v1689 = vld [vmem:[%s1687 + $0x4] sm:$0xf]
      %v1691 = vrot.slane %v1521, 4
      %v1694 = vunpack.c.l.b16 %v1688
      %v1695 = vunpack.c.l.b16 %v1689
      %v1696 = vpack.c.b16 %v1695, %v1694
      %v1699 = vsel %vm1541, %v1691, 0
      %1701 = vmatprep.subr.bf16.mxu0 0
      %1702 = vmatpush1.bf16.msra.mxu0 %v1696
      %1703 = vmatprep.subr.bf16.mxu0 0
      %1704 = vmatpush1.bf16.msra.mxu0 0
      %1705 = vmatprep.subr.bf16.mxu0 0
      %1706 = vmatpush1.bf16.msra.mxu0 0
      %1707 = vmatprep.subr.bf16.mxu0 0
      %1708 = vmatpush1.bf16.msra.mxu0 0
      %1709 = vmatprep.subr.bf16.mxu0 0
      %1710 = vmatpush1.bf16.msra.mxu0 0
      %1711 = vmatprep.subr.bf16.mxu0 0
      %1712 = vmatpush1.bf16.msra.mxu0 0
      %1713 = vmatprep.subr.bf16.mxu0 0
      %1714 = vmatpush1.bf16.msra.mxu0 0
      %1715 = vmatprep.subr.bf16.mxu0 0
      %1716 = vmatpush1.bf16.msra.mxu0 0
      %1717 = vmatprep.subr.bf16.mxu0 0
      %1718 = vmatpush1.bf16.msra.mxu0 0
      %1719 = vmatprep.subr.bf16.mxu0 0
      %1720 = vmatpush1.bf16.msra.mxu0 0
      %1721 = vmatprep.subr.bf16.mxu0 0
      %1722 = vmatpush1.bf16.msra.mxu0 0
      %1723 = vmatprep.subr.bf16.mxu0 0
      %1724 = vmatpush1.bf16.msra.mxu0 0
      %1725 = vmatprep.subr.bf16.mxu0 0
      %1726 = vmatpush1.bf16.msra.mxu0 0
      %1727 = vmatprep.subr.bf16.mxu0 0
      %1728 = vmatpush1.bf16.msra.mxu0 0
      %1729 = vmatprep.subr.bf16.mxu0 0
      %1730 = vmatpush1.bf16.msra.mxu0 0
      %1731 = vmatprep.subr.bf16.mxu0 0
      %1732 = vmatpush1.bf16.msra.mxu0 0
      %1733 = vmatprep.mubr.bf16.mxu0 0
      %1734 = vmatmul.mubr.bf16.gmra.mrb[0].mxu0 %v1699
      %v1735 = vpop.f32.mrb[0].mxu0
      %v1736 = vadd.f32 0.0, %v1735
      %v1737 = vpop.f32.mrb[0].mxu0
      %v1738 = vpop.f32.mrb[0].mxu0
      %v1739 = vpop.f32.mrb[0].mxu0
      %1740 = vdwg.mxu0
      %v1741 = vadd.f32 %v1686, %v1736
      %s1742 = scalar_lea.vmem %s5, 32
      %v1743 = vld [vmem:[%s1742] sm:$0xf]
      %v1744 = vld [vmem:[%s1742 + $0x4] sm:$0xf]
      %v1747 = vunpack.c.l.b16 %v1743
      %v1748 = vunpack.c.l.b16 %v1744
      %v1749 = vpack.c.b16 %v1748, %v1747
      %v1752 = vsel %vm1541, %v1522, 0
      %1754 = vmatprep.subr.bf16.mxu0 0
      %1755 = vmatpush1.bf16.msra.mxu0 %v1749
      %1756 = vmatprep.subr.bf16.mxu0 0
      %1757 = vmatpush1.bf16.msra.mxu0 0
      %1758 = vmatprep.subr.bf16.mxu0 0
      %1759 = vmatpush1.bf16.msra.mxu0 0
      %1760 = vmatprep.subr.bf16.mxu0 0
      %1761 = vmatpush1.bf16.msra.mxu0 0
      %1762 = vmatprep.subr.bf16.mxu0 0
      %1763 = vmatpush1.bf16.msra.mxu0 0
      %1764 = vmatprep.subr.bf16.mxu0 0
      %1765 = vmatpush1.bf16.msra.mxu0 0
      %1766 = vmatprep.subr.bf16.mxu0 0
      %1767 = vmatpush1.bf16.msra.mxu0 0
      %1768 = vmatprep.subr.bf16.mxu0 0
      %1769 = vmatpush1.bf16.msra.mxu0 0
      %1770 = vmatprep.subr.bf16.mxu0 0
      %1771 = vmatpush1.bf16.msra.mxu0 0
      %1772 = vmatprep.subr.bf16.mxu0 0
      %1773 = vmatpush1.bf16.msra.mxu0 0
      %1774 = vmatprep.subr.bf16.mxu0 0
      %1775 = vmatpush1.bf16.msra.mxu0 0
      %1776 = vmatprep.subr.bf16.mxu0 0
      %1777 = vmatpush1.bf16.msra.mxu0 0
      %1778 = vmatprep.subr.bf16.mxu0 0
      %1779 = vmatpush1.bf16.msra.mxu0 0
      %1780 = vmatprep.subr.bf16.mxu0 0
      %1781 = vmatpush1.bf16.msra.mxu0 0
      %1782 = vmatprep.subr.bf16.mxu0 0
      %1783 = vmatpush1.bf16.msra.mxu0 0
      %1784 = vmatprep.subr.bf16.mxu0 0
      %1785 = vmatpush1.bf16.msra.mxu0 0
      %1786 = vmatprep.mubr.bf16.mxu0 0
      %1787 = vmatmul.mubr.bf16.gmra.mrb[0].mxu0 %v1752
      %v1788 = vpop.f32.mrb[0].mxu0
      %v1789 = vadd.f32 0.0, %v1788
      %v1790 = vpop.f32.mrb[0].mxu0
      %v1791 = vpop.f32.mrb[0].mxu0
      %v1792 = vpop.f32.mrb[0].mxu0
      %1793 = vdwg.mxu0
      %v1794 = vadd.f32 %v1741, %v1789
      %s1795 = scalar_lea.vmem %s5, 40
      %v1796 = vld [vmem:[%s1795] sm:$0xf]
      %v1797 = vld [vmem:[%s1795 + $0x4] sm:$0xf]
      %v1799 = vrot.slane %v1522, 4
      %v1802 = vunpack.c.l.b16 %v1796
      %v1803 = vunpack.c.l.b16 %v1797
      %v1804 = vpack.c.b16 %v1803, %v1802
      %v1807 = vsel %vm1541, %v1799, 0
      %1809 = vmatprep.subr.bf16.mxu0 0
      %1810 = vmatpush1.bf16.msra.mxu0 %v1804
      %1811 = vmatprep.subr.bf16.mxu0 0
      %1812 = vmatpush1.bf16.msra.mxu0 0
      %1813 = vmatprep.subr.bf16.mxu0 0
      %1814 = vmatpush1.bf16.msra.mxu0 0
      %1815 = vmatprep.subr.bf16.mxu0 0
      %1816 = vmatpush1.bf16.msra.mxu0 0
      %1817 = vmatprep.subr.bf16.mxu0 0
      %1818 = vmatpush1.bf16.msra.mxu0 0
      %1819 = vmatprep.subr.bf16.mxu0 0
      %1820 = vmatpush1.bf16.msra.mxu0 0
      %1821 = vmatprep.subr.bf16.mxu0 0
      %1822 = vmatpush1.bf16.msra.mxu0 0
      %1823 = vmatprep.subr.bf16.mxu0 0
      %1824 = vmatpush1.bf16.msra.mxu0 0
      %1825 = vmatprep.subr.bf16.mxu0 0
      %1826 = vmatpush1.bf16.msra.mxu0 0
      %1827 = vmatprep.subr.bf16.mxu0 0
      %1828 = vmatpush1.bf16.msra.mxu0 0
      %1829 = vmatprep.subr.bf16.mxu0 0
      %1830 = vmatpush1.bf16.msra.mxu0 0
      %1831 = vmatprep.subr.bf16.mxu0 0
      %1832 = vmatpush1.bf16.msra.mxu0 0
      %1833 = vmatprep.subr.bf16.mxu0 0
      %1834 = vmatpush1.bf16.msra.mxu0 0
      %1835 = vmatprep.subr.bf16.mxu0 0
      %1836 = vmatpush1.bf16.msra.mxu0 0
      %1837 = vmatprep.subr.bf16.mxu0 0
      %1838 = vmatpush1.bf16.msra.mxu0 0
      %1839 = vmatprep.subr.bf16.mxu0 0
      %1840 = vmatpush1.bf16.msra.mxu0 0
      %1841 = vmatprep.mubr.bf16.mxu0 0
      %1842 = vmatmul.mubr.bf16.gmra.mrb[0].mxu0 %v1807
      %v1843 = vpop.f32.mrb[0].mxu0
      %v1844 = vadd.f32 0.0, %v1843
      %v1845 = vpop.f32.mrb[0].mxu0
      %v1846 = vpop.f32.mrb[0].mxu0
      %v1847 = vpop.f32.mrb[0].mxu0
      %1848 = vdwg.mxu0
      %v1849 = vadd.f32 %v1794, %v1844
      %s1850 = scalar_lea.vmem %s5, 48
      %v1851 = vld [vmem:[%s1850] sm:$0xf]
      %v1852 = vld [vmem:[%s1850 + $0x4] sm:$0xf]
      %v1855 = vunpack.c.l.b16 %v1851
      %v1856 = vunpack.c.l.b16 %v1852
      %v1857 = vpack.c.b16 %v1856, %v1855
      %v1860 = vsel %vm1541, %v1523, 0
      %1862 = vmatprep.subr.bf16.mxu0 0
      %1863 = vmatpush1.bf16.msra.mxu0 %v1857
      %1864 = vmatprep.subr.bf16.mxu0 0
      %1865 = vmatpush1.bf16.msra.mxu0 0
      %1866 = vmatprep.subr.bf16.mxu0 0
      %1867 = vmatpush1.bf16.msra.mxu0 0
      %1868 = vmatprep.subr.bf16.mxu0 0
      %1869 = vmatpush1.bf16.msra.mxu0 0
      %1870 = vmatprep.subr.bf16.mxu0 0
      %1871 = vmatpush1.bf16.msra.mxu0 0
      %1872 = vmatprep.subr.bf16.mxu0 0
      %1873 = vmatpush1.bf16.msra.mxu0 0
      %1874 = vmatprep.subr.bf16.mxu0 0
      %1875 = vmatpush1.bf16.msra.mxu0 0
      %1876 = vmatprep.subr.bf16.mxu0 0
      %1877 = vmatpush1.bf16.msra.mxu0 0
      %1878 = vmatprep.subr.bf16.mxu0 0
      %1879 = vmatpush1.bf16.msra.mxu0 0
      %1880 = vmatprep.subr.bf16.mxu0 0
      %1881 = vmatpush1.bf16.msra.mxu0 0
      %1882 = vmatprep.subr.bf16.mxu0 0
      %1883 = vmatpush1.bf16.msra.mxu0 0
      %1884 = vmatprep.subr.bf16.mxu0 0
      %1885 = vmatpush1.bf16.msra.mxu0 0
      %1886 = vmatprep.subr.bf16.mxu0 0
      %1887 = vmatpush1.bf16.msra.mxu0 0
      %1888 = vmatprep.subr.bf16.mxu0 0
      %1889 = vmatpush1.bf16.msra.mxu0 0
      %1890 = vmatprep.subr.bf16.mxu0 0
      %1891 = vmatpush1.bf16.msra.mxu0 0
      %1892 = vmatprep.subr.bf16.mxu0 0
      %1893 = vmatpush1.bf16.msra.mxu0 0
      %1894 = vmatprep.mubr.bf16.mxu0 0
      %1895 = vmatmul.mubr.bf16.gmra.mrb[0].mxu0 %v1860
      %v1896 = vpop.f32.mrb[0].mxu0
      %v1897 = vadd.f32 0.0, %v1896
      %v1898 = vpop.f32.mrb[0].mxu0
      %v1899 = vpop.f32.mrb[0].mxu0
      %v1900 = vpop.f32.mrb[0].mxu0
      %1901 = vdwg.mxu0
      %v1902 = vadd.f32 %v1849, %v1897
      %s1903 = scalar_lea.vmem %s5, 56
      %v1904 = vld [vmem:[%s1903] sm:$0xf]
      %v1905 = vld [vmem:[%s1903 + $0x4] sm:$0xf]
      %v1907 = vrot.slane %v1523, 4
      %v1910 = vunpack.c.l.b16 %v1904
      %v1911 = vunpack.c.l.b16 %v1905
      %v1912 = vpack.c.b16 %v1911, %v1910
      %v1915 = vsel %vm1541, %v1907, 0
      %1917 = vmatprep.subr.bf16.mxu0 0
      %1918 = vmatpush1.bf16.msra.mxu0 %v1912
      %1919 = vmatprep.subr.bf16.mxu0 0
      %1920 = vmatpush1.bf16.msra.mxu0 0
      %1921 = vmatprep.subr.bf16.mxu0 0
      %1922 = vmatpush1.bf16.msra.mxu0 0
      %1923 = vmatprep.subr.bf16.mxu0 0
      %1924 = vmatpush1.bf16.msra.mxu0 0
      %1925 = vmatprep.subr.bf16.mxu0 0
      %1926 = vmatpush1.bf16.msra.mxu0 0
      %1927 = vmatprep.subr.bf16.mxu0 0
      %1928 = vmatpush1.bf16.msra.mxu0 0
      %1929 = vmatprep.subr.bf16.mxu0 0
      %1930 = vmatpush1.bf16.msra.mxu0 0
      %1931 = vmatprep.subr.bf16.mxu0 0
      %1932 = vmatpush1.bf16.msra.mxu0 0
      %1933 = vmatprep.subr.bf16.mxu0 0
      %1934 = vmatpush1.bf16.msra.mxu0 0
      %1935 = vmatprep.subr.bf16.mxu0 0
      %1936 = vmatpush1.bf16.msra.mxu0 0
      %1937 = vmatprep.subr.bf16.mxu0 0
      %1938 = vmatpush1.bf16.msra.mxu0 0
      %1939 = vmatprep.subr.bf16.mxu0 0
      %1940 = vmatpush1.bf16.msra.mxu0 0
      %1941 = vmatprep.subr.bf16.mxu0 0
      %1942 = vmatpush1.bf16.msra.mxu0 0
      %1943 = vmatprep.subr.bf16.mxu0 0
      %1944 = vmatpush1.bf16.msra.mxu0 0
      %1945 = vmatprep.subr.bf16.mxu0 0
      %1946 = vmatpush1.bf16.msra.mxu0 0
      %1947 = vmatprep.subr.bf16.mxu0 0
      %1948 = vmatpush1.bf16.msra.mxu0 0
      %1949 = vmatprep.mubr.bf16.mxu0 0
      %1950 = vmatmul.mubr.bf16.gmra.mrb[0].mxu0 %v1915
      %v1951 = vpop.f32.mrb[0].mxu0
      %v1952 = vadd.f32 0.0, %v1951
      %v1953 = vpop.f32.mrb[0].mxu0
      %v1954 = vpop.f32.mrb[0].mxu0
      %v1955 = vpop.f32.mrb[0].mxu0
      %1956 = vdwg.mxu0
      %v1957 = vadd.f32 %v1902, %v1952
      %s1958 = scalar_lea.vmem %s5, 64
      %v1959 = vld [vmem:[%s1958] sm:$0xf]
      %v1960 = vld [vmem:[%s1958 + $0x4] sm:$0xf]
      %v1963 = vunpack.c.l.b16 %v1959
      %v1964 = vunpack.c.l.b16 %v1960
      %v1965 = vpack.c.b16 %v1964, %v1963
      %v1968 = vsel %vm1541, %v1524, 0
      %1970 = vmatprep.subr.bf16.mxu0 0
      %1971 = vmatpush1.bf16.msra.mxu0 %v1965
      %1972 = vmatprep.subr.bf16.mxu0 0
      %1973 = vmatpush1.bf16.msra.mxu0 0
      %1974 = vmatprep.subr.bf16.mxu0 0
      %1975 = vmatpush1.bf16.msra.mxu0 0
      %1976 = vmatprep.subr.bf16.mxu0 0
      %1977 = vmatpush1.bf16.msra.mxu0 0
      %1978 = vmatprep.subr.bf16.mxu0 0
      %1979 = vmatpush1.bf16.msra.mxu0 0
      %1980 = vmatprep.subr.bf16.mxu0 0
      %1981 = vmatpush1.bf16.msra.mxu0 0
      %1982 = vmatprep.subr.bf16.mxu0 0
      %1983 = vmatpush1.bf16.msra.mxu0 0
      %1984 = vmatprep.subr.bf16.mxu0 0
      %1985 = vmatpush1.bf16.msra.mxu0 0
      %1986 = vmatprep.subr.bf16.mxu0 0
      %1987 = vmatpush1.bf16.msra.mxu0 0
      %1988 = vmatprep.subr.bf16.mxu0 0
      %1989 = vmatpush1.bf16.msra.mxu0 0
      %1990 = vmatprep.subr.bf16.mxu0 0
      %1991 = vmatpush1.bf16.msra.mxu0 0
      %1992 = vmatprep.subr.bf16.mxu0 0
      %1993 = vmatpush1.bf16.msra.mxu0 0
      %1994 = vmatprep.subr.bf16.mxu0 0
      %1995 = vmatpush1.bf16.msra.mxu0 0
      %1996 = vmatprep.subr.bf16.mxu0 0
      %1997 = vmatpush1.bf16.msra.mxu0 0
      %1998 = vmatprep.subr.bf16.mxu0 0
      %1999 = vmatpush1.bf16.msra.mxu0 0
      %2000 = vmatprep.subr.bf16.mxu0 0
      %2001 = vmatpush1.bf16.msra.mxu0 0
      %2002 = vmatprep.mubr.bf16.mxu0 0
      %2003 = vmatmul.mubr.bf16.gmra.mrb[0].mxu0 %v1968
      %v2004 = vpop.f32.mrb[0].mxu0
      %v2005 = vadd.f32 0.0, %v2004
      %v2006 = vpop.f32.mrb[0].mxu0
      %v2007 = vpop.f32.mrb[0].mxu0
      %v2008 = vpop.f32.mrb[0].mxu0
      %2009 = vdwg.mxu0
      %v2010 = vadd.f32 %v1957, %v2005
      %s2011 = scalar_lea.vmem %s5, 72
      %v2012 = vld [vmem:[%s2011] sm:$0xf]
      %v2013 = vld [vmem:[%s2011 + $0x4] sm:$0xf]
      %v2015 = vrot.slane %v1524, 4
      %v2018 = vunpack.c.l.b16 %v2012
      %v2019 = vunpack.c.l.b16 %v2013
      %v2020 = vpack.c.b16 %v2019, %v2018
      %v2023 = vsel %vm1541, %v2015, 0
      %2025 = vmatprep.subr.bf16.mxu0 0
      %2026 = vmatpush1.bf16.msra.mxu0 %v2020
      %2027 = vmatprep.subr.bf16.mxu0 0
      %2028 = vmatpush1.bf16.msra.mxu0 0
      %2029 = vmatprep.subr.bf16.mxu0 0
      %2030 = vmatpush1.bf16.msra.mxu0 0
      %2031 = vmatprep.subr.bf16.mxu0 0
      %2032 = vmatpush1.bf16.msra.mxu0 0
      %2033 = vmatprep.subr.bf16.mxu0 0
      %2034 = vmatpush1.bf16.msra.mxu0 0
      %2035 = vmatprep.subr.bf16.mxu0 0
      %2036 = vmatpush1.bf16.msra.mxu0 0
      %2037 = vmatprep.subr.bf16.mxu0 0
      %2038 = vmatpush1.bf16.msra.mxu0 0
      %2039 = vmatprep.subr.bf16.mxu0 0
      %2040 = vmatpush1.bf16.msra.mxu0 0
      %2041 = vmatprep.subr.bf16.mxu0 0
      %2042 = vmatpush1.bf16.msra.mxu0 0
      %2043 = vmatprep.subr.bf16.mxu0 0
      %2044 = vmatpush1.bf16.msra.mxu0 0
      %2045 = vmatprep.subr.bf16.mxu0 0
      %2046 = vmatpush1.bf16.msra.mxu0 0
      %2047 = vmatprep.subr.bf16.mxu0 0
      %2048 = vmatpush1.bf16.msra.mxu0 0
      %2049 = vmatprep.subr.bf16.mxu0 0
      %2050 = vmatpush1.bf16.msra.mxu0 0
      %2051 = vmatprep.subr.bf16.mxu0 0
      %2052 = vmatpush1.bf16.msra.mxu0 0
      %2053 = vmatprep.subr.bf16.mxu0 0
      %2054 = vmatpush1.bf16.msra.mxu0 0
      %2055 = vmatprep.subr.bf16.mxu0 0
      %2056 = vmatpush1.bf16.msra.mxu0 0
      %2057 = vmatprep.mubr.bf16.mxu0 0
      %2058 = vmatmul.mubr.bf16.gmra.mrb[0].mxu0 %v2023
      %v2059 = vpop.f32.mrb[0].mxu0
      %v2060 = vadd.f32 0.0, %v2059
      %v2061 = vpop.f32.mrb[0].mxu0
      %v2062 = vpop.f32.mrb[0].mxu0
      %v2063 = vpop.f32.mrb[0].mxu0
      %2064 = vdwg.mxu0
      %v2065 = vadd.f32 %v2010, %v2060
      %s2066 = scalar_lea.vmem %s5, 80
      %v2067 = vld [vmem:[%s2066] sm:$0xf]
      %v2068 = vld [vmem:[%s2066 + $0x4] sm:$0xf]
      %v2071 = vunpack.c.l.b16 %v2067
      %v2072 = vunpack.c.l.b16 %v2068
      %v2073 = vpack.c.b16 %v2072, %v2071
      %v2076 = vsel %vm1541, %v1525, 0
      %2078 = vmatprep.subr.bf16.mxu0 0
      %2079 = vmatpush1.bf16.msra.mxu0 %v2073
      %2080 = vmatprep.subr.bf16.mxu0 0
      %2081 = vmatpush1.bf16.msra.mxu0 0
      %2082 = vmatprep.subr.bf16.mxu0 0
      %2083 = vmatpush1.bf16.msra.mxu0 0
      %2084 = vmatprep.subr.bf16.mxu0 0
      %2085 = vmatpush1.bf16.msra.mxu0 0
      %2086 = vmatprep.subr.bf16.mxu0 0
      %2087 = vmatpush1.bf16.msra.mxu0 0
      %2088 = vmatprep.subr.bf16.mxu0 0
      %2089 = vmatpush1.bf16.msra.mxu0 0
      %2090 = vmatprep.subr.bf16.mxu0 0
      %2091 = vmatpush1.bf16.msra.mxu0 0
      %2092 = vmatprep.subr.bf16.mxu0 0
      %2093 = vmatpush1.bf16.msra.mxu0 0
      %2094 = vmatprep.subr.bf16.mxu0 0
      %2095 = vmatpush1.bf16.msra.mxu0 0
      %2096 = vmatprep.subr.bf16.mxu0 0
      %2097 = vmatpush1.bf16.msra.mxu0 0
      %2098 = vmatprep.subr.bf16.mxu0 0
      %2099 = vmatpush1.bf16.msra.mxu0 0
      %2100 = vmatprep.subr.bf16.mxu0 0
      %2101 = vmatpush1.bf16.msra.mxu0 0
      %2102 = vmatprep.subr.bf16.mxu0 0
      %2103 = vmatpush1.bf16.msra.mxu0 0
      %2104 = vmatprep.subr.bf16.mxu0 0
      %2105 = vmatpush1.bf16.msra.mxu0 0
      %2106 = vmatprep.subr.bf16.mxu0 0
      %2107 = vmatpush1.bf16.msra.mxu0 0
      %2108 = vmatprep.subr.bf16.mxu0 0
      %2109 = vmatpush1.bf16.msra.mxu0 0
      %2110 = vmatprep.mubr.bf16.mxu0 0
      %2111 = vmatmul.mubr.bf16.gmra.mrb[0].mxu0 %v2076
      %v2112 = vpop.f32.mrb[0].mxu0
      %v2113 = vadd.f32 0.0, %v2112
      %v2114 = vpop.f32.mrb[0].mxu0
      %v2115 = vpop.f32.mrb[0].mxu0
      %v2116 = vpop.f32.mrb[0].mxu0
      %2117 = vdwg.mxu0
      %v2118 = vadd.f32 %v2065, %v2113
      %s2119 = scalar_lea.vmem %s5, 88
      %v2120 = vld [vmem:[%s2119] sm:$0xf]
      %v2121 = vld [vmem:[%s2119 + $0x4] sm:$0xf]
      %v2123 = vrot.slane %v1525, 4
      %v2126 = vunpack.c.l.b16 %v2120
      %v2127 = vunpack.c.l.b16 %v2121
      %v2128 = vpack.c.b16 %v2127, %v2126
      %v2131 = vsel %vm1541, %v2123, 0
      %2133 = vmatprep.subr.bf16.mxu0 0
      %2134 = vmatpush1.bf16.msra.mxu0 %v2128
      %2135 = vmatprep.subr.bf16.mxu0 0
      %2136 = vmatpush1.bf16.msra.mxu0 0
      %2137 = vmatprep.subr.bf16.mxu0 0
      %2138 = vmatpush1.bf16.msra.mxu0 0
      %2139 = vmatprep.subr.bf16.mxu0 0
      %2140 = vmatpush1.bf16.msra.mxu0 0
      %2141 = vmatprep.subr.bf16.mxu0 0
      %2142 = vmatpush1.bf16.msra.mxu0 0
      %2143 = vmatprep.subr.bf16.mxu0 0
      %2144 = vmatpush1.bf16.msra.mxu0 0
      %2145 = vmatprep.subr.bf16.mxu0 0
      %2146 = vmatpush1.bf16.msra.mxu0 0
      %2147 = vmatprep.subr.bf16.mxu0 0
      %2148 = vmatpush1.bf16.msra.mxu0 0
      %2149 = vmatprep.subr.bf16.mxu0 0
      %2150 = vmatpush1.bf16.msra.mxu0 0
      %2151 = vmatprep.subr.bf16.mxu0 0
      %2152 = vmatpush1.bf16.msra.mxu0 0
      %2153 = vmatprep.subr.bf16.mxu0 0
      %2154 = vmatpush1.bf16.msra.mxu0 0
      %2155 = vmatprep.subr.bf16.mxu0 0
      %2156 = vmatpush1.bf16.msra.mxu0 0
      %2157 = vmatprep.subr.bf16.mxu0 0
      %2158 = vmatpush1.bf16.msra.mxu0 0
      %2159 = vmatprep.subr.bf16.mxu0 0
      %2160 = vmatpush1.bf16.msra.mxu0 0
      %2161 = vmatprep.subr.bf16.mxu0 0
      %2162 = vmatpush1.bf16.msra.mxu0 0
      %2163 = vmatprep.subr.bf16.mxu0 0
      %2164 = vmatpush1.bf16.msra.mxu0 0
      %2165 = vmatprep.mubr.bf16.mxu0 0
      %2166 = vmatmul.mubr.bf16.gmra.mrb[0].mxu0 %v2131
      %v2167 = vpop.f32.mrb[0].mxu0
      %v2168 = vadd.f32 0.0, %v2167
      %v2169 = vpop.f32.mrb[0].mxu0
      %v2170 = vpop.f32.mrb[0].mxu0
      %v2171 = vpop.f32.mrb[0].mxu0
      %2172 = vdwg.mxu0
      %v2173 = vadd.f32 %v2118, %v2168
      %s2174 = scalar_lea.vmem %s5, 96
      %v2175 = vld [vmem:[%s2174] sm:$0xf]
      %v2176 = vld [vmem:[%s2174 + $0x4] sm:$0xf]
      %v2179 = vunpack.c.l.b16 %v2175
      %v2180 = vunpack.c.l.b16 %v2176
      %v2181 = vpack.c.b16 %v2180, %v2179
      %v2184 = vsel %vm1541, %v1526, 0
      %2186 = vmatprep.subr.bf16.mxu0 0
      %2187 = vmatpush1.bf16.msra.mxu0 %v2181
      %2188 = vmatprep.subr.bf16.mxu0 0
      %2189 = vmatpush1.bf16.msra.mxu0 0
      %2190 = vmatprep.subr.bf16.mxu0 0
      %2191 = vmatpush1.bf16.msra.mxu0 0
      %2192 = vmatprep.subr.bf16.mxu0 0
      %2193 = vmatpush1.bf16.msra.mxu0 0
      %2194 = vmatprep.subr.bf16.mxu0 0
      %2195 = vmatpush1.bf16.msra.mxu0 0
      %2196 = vmatprep.subr.bf16.mxu0 0
      %2197 = vmatpush1.bf16.msra.mxu0 0
      %2198 = vmatprep.subr.bf16.mxu0 0
      %2199 = vmatpush1.bf16.msra.mxu0 0
      %2200 = vmatprep.subr.bf16.mxu0 0
      %2201 = vmatpush1.bf16.msra.mxu0 0
      %2202 = vmatprep.subr.bf16.mxu0 0
      %2203 = vmatpush1.bf16.msra.mxu0 0
      %2204 = vmatprep.subr.bf16.mxu0 0
      %2205 = vmatpush1.bf16.msra.mxu0 0
      %2206 = vmatprep.subr.bf16.mxu0 0
      %2207 = vmatpush1.bf16.msra.mxu0 0
      %2208 = vmatprep.subr.bf16.mxu0 0
      %2209 = vmatpush1.bf16.msra.mxu0 0
      %2210 = vmatprep.subr.bf16.mxu0 0
      %2211 = vmatpush1.bf16.msra.mxu0 0
      %2212 = vmatprep.subr.bf16.mxu0 0
      %2213 = vmatpush1.bf16.msra.mxu0 0
      %2214 = vmatprep.subr.bf16.mxu0 0
      %2215 = vmatpush1.bf16.msra.mxu0 0
      %2216 = vmatprep.subr.bf16.mxu0 0
      %2217 = vmatpush1.bf16.msra.mxu0 0
      %2218 = vmatprep.mubr.bf16.mxu0 0
      %2219 = vmatmul.mubr.bf16.gmra.mrb[0].mxu0 %v2184
      %v2220 = vpop.f32.mrb[0].mxu0
      %v2221 = vadd.f32 0.0, %v2220
      %v2222 = vpop.f32.mrb[0].mxu0
      %v2223 = vpop.f32.mrb[0].mxu0
      %v2224 = vpop.f32.mrb[0].mxu0
      %2225 = vdwg.mxu0
      %v2226 = vadd.f32 %v2173, %v2221
      %s2227 = scalar_lea.vmem %s5, 104
      %v2228 = vld [vmem:[%s2227] sm:$0xf]
      %v2229 = vld [vmem:[%s2227 + $0x4] sm:$0xf]
      %v2231 = vrot.slane %v1526, 4
      %v2234 = vunpack.c.l.b16 %v2228
      %v2235 = vunpack.c.l.b16 %v2229
      %v2236 = vpack.c.b16 %v2235, %v2234
      %v2239 = vsel %vm1541, %v2231, 0
      %2241 = vmatprep.subr.bf16.mxu0 0
      %2242 = vmatpush1.bf16.msra.mxu0 %v2236
      %2243 = vmatprep.subr.bf16.mxu0 0
      %2244 = vmatpush1.bf16.msra.mxu0 0
      %2245 = vmatprep.subr.bf16.mxu0 0
      %2246 = vmatpush1.bf16.msra.mxu0 0
      %2247 = vmatprep.subr.bf16.mxu0 0
      %2248 = vmatpush1.bf16.msra.mxu0 0
      %2249 = vmatprep.subr.bf16.mxu0 0
      %2250 = vmatpush1.bf16.msra.mxu0 0
      %2251 = vmatprep.subr.bf16.mxu0 0
      %2252 = vmatpush1.bf16.msra.mxu0 0
      %2253 = vmatprep.subr.bf16.mxu0 0
      %2254 = vmatpush1.bf16.msra.mxu0 0
      %2255 = vmatprep.subr.bf16.mxu0 0
      %2256 = vmatpush1.bf16.msra.mxu0 0
      %2257 = vmatprep.subr.bf16.mxu0 0
      %2258 = vmatpush1.bf16.msra.mxu0 0
      %2259 = vmatprep.subr.bf16.mxu0 0
      %2260 = vmatpush1.bf16.msra.mxu0 0
      %2261 = vmatprep.subr.bf16.mxu0 0
      %2262 = vmatpush1.bf16.msra.mxu0 0
      %2263 = vmatprep.subr.bf16.mxu0 0
      %2264 = vmatpush1.bf16.msra.mxu0 0
      %2265 = vmatprep.subr.bf16.mxu0 0
      %2266 = vmatpush1.bf16.msra.mxu0 0
      %2267 = vmatprep.subr.bf16.mxu0 0
      %2268 = vmatpush1.bf16.msra.mxu0 0
      %2269 = vmatprep.subr.bf16.mxu0 0
      %2270 = vmatpush1.bf16.msra.mxu0 0
      %2271 = vmatprep.subr.bf16.mxu0 0
      %2272 = vmatpush1.bf16.msra.mxu0 0
      %2273 = vmatprep.mubr.bf16.mxu0 0
      %2274 = vmatmul.mubr.bf16.gmra.mrb[0].mxu0 %v2239
      %v2275 = vpop.f32.mrb[0].mxu0
      %v2276 = vadd.f32 0.0, %v2275
      %v2277 = vpop.f32.mrb[0].mxu0
      %v2278 = vpop.f32.mrb[0].mxu0
      %v2279 = vpop.f32.mrb[0].mxu0
      %2280 = vdwg.mxu0
      %v2281 = vadd.f32 %v2226, %v2276
      %s2282 = scalar_lea.vmem %s5, 112
      %v2283 = vld [vmem:[%s2282] sm:$0xf]
      %v2284 = vld [vmem:[%s2282 + $0x4] sm:$0xf]
      %v2287 = vunpack.c.l.b16 %v2283
      %v2288 = vunpack.c.l.b16 %v2284
      %v2289 = vpack.c.b16 %v2288, %v2287
      %v2292 = vsel %vm1541, %v1527, 0
      %2294 = vmatprep.subr.bf16.mxu0 0
      %2295 = vmatpush1.bf16.msra.mxu0 %v2289
      %2296 = vmatprep.subr.bf16.mxu0 0
      %2297 = vmatpush1.bf16.msra.mxu0 0
      %2298 = vmatprep.subr.bf16.mxu0 0
      %2299 = vmatpush1.bf16.msra.mxu0 0
      %2300 = vmatprep.subr.bf16.mxu0 0
      %2301 = vmatpush1.bf16.msra.mxu0 0
      %2302 = vmatprep.subr.bf16.mxu0 0
      %2303 = vmatpush1.bf16.msra.mxu0 0
      %2304 = vmatprep.subr.bf16.mxu0 0
      %2305 = vmatpush1.bf16.msra.mxu0 0
      %2306 = vmatprep.subr.bf16.mxu0 0
      %2307 = vmatpush1.bf16.msra.mxu0 0
      %2308 = vmatprep.subr.bf16.mxu0 0
      %2309 = vmatpush1.bf16.msra.mxu0 0
      %2310 = vmatprep.subr.bf16.mxu0 0
      %2311 = vmatpush1.bf16.msra.mxu0 0
      %2312 = vmatprep.subr.bf16.mxu0 0
      %2313 = vmatpush1.bf16.msra.mxu0 0
      %2314 = vmatprep.subr.bf16.mxu0 0
      %2315 = vmatpush1.bf16.msra.mxu0 0
      %2316 = vmatprep.subr.bf16.mxu0 0
      %2317 = vmatpush1.bf16.msra.mxu0 0
      %2318 = vmatprep.subr.bf16.mxu0 0
      %2319 = vmatpush1.bf16.msra.mxu0 0
      %2320 = vmatprep.subr.bf16.mxu0 0
      %2321 = vmatpush1.bf16.msra.mxu0 0
      %2322 = vmatprep.subr.bf16.mxu0 0
      %2323 = vmatpush1.bf16.msra.mxu0 0
      %2324 = vmatprep.subr.bf16.mxu0 0
      %2325 = vmatpush1.bf16.msra.mxu0 0
      %2326 = vmatprep.mubr.bf16.mxu0 0
      %2327 = vmatmul.mubr.bf16.gmra.mrb[0].mxu0 %v2292
      %v2328 = vpop.f32.mrb[0].mxu0
      %v2329 = vadd.f32 0.0, %v2328
      %v2330 = vpop.f32.mrb[0].mxu0
      %v2331 = vpop.f32.mrb[0].mxu0
      %v2332 = vpop.f32.mrb[0].mxu0
      %2333 = vdwg.mxu0
      %v2334 = vadd.f32 %v2281, %v2329
      %s2335 = scalar_lea.vmem %s5, 120
      %v2336 = vld [vmem:[%s2335] sm:$0xf]
      %v2337 = vld [vmem:[%s2335 + $0x4] sm:$0xf]
      %v2339 = vrot.slane %v1527, 4
      %v2342 = vunpack.c.l.b16 %v2336
      %v2343 = vunpack.c.l.b16 %v2337
      %v2344 = vpack.c.b16 %v2343, %v2342
      %v2347 = vsel %vm1541, %v2339, 0
      %2349 = vmatprep.subr.bf16.mxu0 0
      %2350 = vmatpush1.bf16.msra.mxu0 %v2344
      %2351 = vmatprep.subr.bf16.mxu0 0
      %2352 = vmatpush1.bf16.msra.mxu0 0
      %2353 = vmatprep.subr.bf16.mxu0 0
      %2354 = vmatpush1.bf16.msra.mxu0 0
      %2355 = vmatprep.subr.bf16.mxu0 0
      %2356 = vmatpush1.bf16.msra.mxu0 0
      %2357 = vmatprep.subr.bf16.mxu0 0
      %2358 = vmatpush1.bf16.msra.mxu0 0
      %2359 = vmatprep.subr.bf16.mxu0 0
      %2360 = vmatpush1.bf16.msra.mxu0 0
      %2361 = vmatprep.subr.bf16.mxu0 0
      %2362 = vmatpush1.bf16.msra.mxu0 0
      %2363 = vmatprep.subr.bf16.mxu0 0
      %2364 = vmatpush1.bf16.msra.mxu0 0
      %2365 = vmatprep.subr.bf16.mxu0 0
      %2366 = vmatpush1.bf16.msra.mxu0 0
      %2367 = vmatprep.subr.bf16.mxu0 0
      %2368 = vmatpush1.bf16.msra.mxu0 0
      %2369 = vmatprep.subr.bf16.mxu0 0
      %2370 = vmatpush1.bf16.msra.mxu0 0
      %2371 = vmatprep.subr.bf16.mxu0 0
      %2372 = vmatpush1.bf16.msra.mxu0 0
      %2373 = vmatprep.subr.bf16.mxu0 0
      %2374 = vmatpush1.bf16.msra.mxu0 0
      %2375 = vmatprep.subr.bf16.mxu0 0
      %2376 = vmatpush1.bf16.msra.mxu0 0
      %2377 = vmatprep.subr.bf16.mxu0 0
      %2378 = vmatpush1.bf16.msra.mxu0 0
      %2379 = vmatprep.subr.bf16.mxu0 0
      %2380 = vmatpush1.bf16.msra.mxu0 0
      %2381 = vmatprep.mubr.bf16.mxu0 0
      %2382 = vmatmul.mubr.bf16.gmra.mrb[0].mxu0 %v2347
      %v2383 = vpop.f32.mrb[0].mxu0
      %v2384 = vadd.f32 0.0, %v2383
      %v2385 = vpop.f32.mrb[0].mxu0
      %v2386 = vpop.f32.mrb[0].mxu0
      %v2387 = vpop.f32.mrb[0].mxu0
      %2388 = vdwg.mxu0
      %v2389 = vadd.f32 %v2334, %v2384
      %v2390 = vld [vmem:[%s6] sm:$0x1]
      %v2392 = vlaneseq
      %v2393 = vshrl.u32 %v2392, 7
      %v2394 = vsub.s32 0, %v2393
      %v2395 = vrot.slane %v2390, %v2394
      %v2397 = vadd.f32 %v2389, %v2395
      %2398 = vst [vmem:[%s276] sm:$0xff] %v2397
      %p2399 = scmp.lt.s32.totalorder %s18, 1
      %s2400 = scalar_select %p2399, %s18, 1
      %s2401 = smul.addr %s2400, 8
      %s2402 = scalar_lea.vmem %s7, %s2401
      // Predicated region
      $region49: #{critic_forward.1} parent=47 // pred_check
        %p2403 = pneg %p188
      $region50: #{critic_forward.1} parent=47 // pred_check_branch
        %2405 = sbr.rel (%p2403) target = $region52
      $region51: #{critic_forward.1} parent=47 // pred_region
        _
      $region52: #{critic_forward.1} parent=47 // pred_fallthru
        _
    $region48: #{critic_forward.1} parent=5 // pred_fallthru
      _
    %p2406 = scmp.le.s32.totalorder 2, %s13
    // Predicated region
    $region53: #{critic_forward.1} parent=5 // pred_check
      %p2407 = pneg %p2406
    $region54: #{critic_forward.1} parent=5 // pred_check_branch
      %2409 = sbr.rel (%p2407) target = $region56
    $region55: #{critic_forward.1} parent=5 // pred_region
      %s2410 = ssub.s32 %s13, 2
      // Predicated region
      $region57: #{critic_forward.1} parent=55 // pred_check
        %p2411 = pneg %p194
      $region58: #{critic_forward.1} parent=55 // pred_check_branch
        %2413 = sbr.rel (%p2411) target = $region60
      $region59: #{critic_forward.1} parent=55 // pred_region
        %p2414 = scmp.lt.s32.totalorder %s19, 1
        %s2415 = scalar_select %p2414, %s19, 1
        %s2416 = smul.addr %s2415, 8
        %s2417 = scalar_lea.vmem %s7, %s2416
      $region60: #{critic_forward.1} parent=55 // pred_fallthru
        _
    $region56: #{critic_forward.1} parent=5 // pred_fallthru
      _
  $region6: #{critic_forward.1} parent=0 // loop_footer
    %s17 = sadd.s32 1, %s13
  $region7: #{critic_forward.1} parent=0 // loop_footer_branch
    %12 = sbr.rel target = $region3
  $region8: #{critic_forward.1} parent=0 // loop_exit
    _

</llo_original>
